<compile_context>
chip_gen: v6e
topology: v6e:2x2x1
jax: 0.10.0
libtpu: 0.0.40
codegen_flags: <defaults>
</compile_context>

<pallas_src>
import math
import jax
import jax.numpy as jnp
from jax import lax
from jax.experimental import pallas as pl
from jax.experimental.pallas import tpu as pltpu


def _softmax_rows(logits):
    m = jnp.max(logits, axis=-1, keepdims=True)
    e = jnp.exp(logits - m)
    return e * pl.reciprocal(jnp.sum(e, axis=-1, keepdims=True), approx=True)


def _gcn_fused_kernel(x_ref, adj_ref, mask_ref, w_ref, b_ref, wo_ref, bo_ref,
                      out_ref):
    """Fused 2-layer GCN.

    x/out:  (B*N, F) lane-dense batch-major activation slab (f32).
    adj:    (3, B*N, B*N) block-diagonal adjacency (MXU dtype).
    mask:   (2*B*N, B*N) additive attention mask (0 within a batch block,
            -1e30 across batches) so one softmax covers all examples.
    w:      (L, 4, F, F) = [W0, W1, W2, W_highway] per layer (MXU dtype).
    b:      (L, 4, 1, F) matching biases (f32).
    wo:     (L, 2, F, F) = [o_proj_0.W^T, o_proj_1.W^T] (MXU dtype).
    bo:     (L, 1, F)    = o_proj_0.b + o_proj_1.b (f32).
    """
    BN, F = x_ref.shape
    n_layers = w_ref.shape[0]
    mxu_dtype = w_ref.dtype

    x = x_ref[...].astype(jnp.float32)        # activation, kept in f32
    mask = mask_ref[...]                      # (2BN, BN) f32
    adj_k = adj_ref[0]                        # (BN, BN) MXU dtype
    adj_q = adj_ref[1]
    adj_v = adj_ref[2]

    for layer in range(n_layers):
        xb = x.astype(mxu_dtype)

        # 4 support matmuls (edge types 0..2 + highway pre-activation).
        sup = [jnp.dot(xb, w_ref[layer, c],
                       preferred_element_type=jnp.float32) + b_ref[layer, c]
               for c in range(4)]

        # Block-diagonal aggregation: all batch elements in 3 matmuls.
        k = jnp.dot(adj_k, sup[0].astype(mxu_dtype),
                    preferred_element_type=jnp.float32)
        q = jnp.dot(adj_q, sup[1].astype(mxu_dtype),
                    preferred_element_type=jnp.float32)
        v = jnp.dot(adj_v, sup[2].astype(mxu_dtype),
                    preferred_element_type=jnp.float32)

        # Both attention branches batched: [q; v] vs k, one softmax pass.
        k_m = k.astype(mxu_dtype)
        qv = jnp.concatenate([q, v], axis=0).astype(mxu_dtype)   # (2BN, F)
        logits = lax.dot_general(qv, k_m, (((1,), (1,)), ((), ())),
                                 preferred_element_type=jnp.float32) + mask
        probs = _softmax_rows(logits)                            # (2BN, BN) f32
        ctx = jnp.dot(probs.astype(mxu_dtype), k_m,
                      preferred_element_type=jnp.float32)        # (2BN, F)

        # o_proj_0 / o_proj_1 as two accumulating (BN,F)@(F,F) matmuls.
        s01 = (jnp.dot(ctx[:BN].astype(mxu_dtype), wo_ref[layer, 0],
                       preferred_element_type=jnp.float32)
               + jnp.dot(ctx[BN:].astype(mxu_dtype), wo_ref[layer, 1],
                         preferred_element_type=jnp.float32)
               + bo_ref[layer])

        o = jnp.maximum(q + v + s01, 0.0)        # activation: relu (f32)
        t = jax.nn.sigmoid(sup[3])               # highway: sigmoid (f32)
        x = o * t + x * (1.0 - t)                # highway mix (f32)

    out_ref[...] = x.astype(out_ref.dtype)


# ---------------- wrapper-side packing (pure layout plumbing) ----------------
def _block_diag_adj(adj):
    """(3, B, N, N) -> (3, B*N, B*N) block-diagonal over batch."""
    C, B, N, _ = adj.shape
    eye = jnp.eye(B, dtype=adj.dtype)
    bd = jnp.einsum('cbij,bd->cbidj', adj, eye)
    return bd.reshape(C, B * N, B * N)


def _attention_mask(B, N):
    """(2*B*N, B*N) additive mask: 0 within a batch block, -1e30 otherwise."""
    batch_id = jnp.repeat(jnp.arange(B), N)
    same = batch_id[:, None] == batch_id[None, :]
    m = jnp.where(same, 0.0, -1e30).astype(jnp.float32)
    return jnp.concatenate([m, m], axis=0)


def graph_convolution_forward(inputs_nbf, adj, packed):
    """Full GraphConvolution (n_layers=2), fused into one pallas_call.
    inputs: (N, B, F) PyTorch layout; adj: (3, B, N, N) row-normalized."""
    # TODO(synk): nn.Dropout / edge-dropout are identity in eval mode; training
    # mode dropout is not implemented here.
    N, B, F = inputs_nbf.shape
    BN = B * N
    w_sup, b_sup, wo, bo = packed
    mxu_dtype = w_sup.dtype

    # Lane-dense (B*N, F) activation slab + block-diag adjacency + attn mask.
    x2d = inputs_nbf.transpose(1, 0, 2).reshape(BN, F)
    adj_bd = _block_diag_adj(adj).astype(mxu_dtype)
    mask = _attention_mask(B, N)

    vmem = pl.BlockSpec(memory_space=pltpu.MemorySpace.VMEM)
    out2d = pl.pallas_call(
        _gcn_fused_kernel,
        out_shape=jax.ShapeDtypeStruct((BN, F), inputs_nbf.dtype),
        in_specs=[vmem] * 7,
        out_specs=vmem,
    )(x2d, adj_bd, mask, w_sup, b_sup, wo, bo)

    # Back to the PyTorch (N, B, F) layout.
    return out2d.reshape(B, N, F).transpose(1, 0, 2)


# ---------------- parameter packing (done once, outside the kernel) ----------
def pack_layer_params(params):
    """Per-layer packing:
       w_sup = stack(W0, W1, W2, W_highway)   (4, F, F)
       b_sup = stack(b0, b1, b2, b_highway)   (4, 1, F)
       wo    = stack(o_proj_0.W^T, o_proj_1.W^T)  (2, F, F)
       bo    = o_proj_0.b + o_proj_1.b        (1, F)
    """
    w, b, wo0, bo0, wo1, bo1, wh, bh = params
    w_sup = jnp.concatenate([w, wh[None]], axis=0)
    b_sup = jnp.concatenate([b, bh[None]], axis=0)
    wo = jnp.stack([wo0.T, wo1.T], axis=0)
    bo = bo0 + bo1
    return w_sup, b_sup, wo, bo


def pack_params(p1, p2, mxu_dtype=jnp.bfloat16):
    """Stack both layers (leading layer axis); MXU operands in mxu_dtype."""
    l1 = pack_layer_params(p1)
    l2 = pack_layer_params(p2)
    w_sup, b_sup, wo, bo = (jnp.stack([a, c], axis=0) for a, c in zip(l1, l2))
    return (w_sup.astype(mxu_dtype), b_sup, wo.astype(mxu_dtype), bo)


# ---------------- pure-JAX reference (mirrors the PyTorch forward) ------------
def _gcn_layer_ref(x_nbf, adj, params):
    w, b, wo0, bo0, wo1, bo1, wh, bh = params
    N, B, F = x_nbf.shape
    outs = []
    for i in range(B):
        xi = x_nbf[:, i, :]                               # (N, F)
        support = jnp.einsum('nf,cfo->cno', xi, w) + b    # (3, N, F)
        k = adj[0, i] @ support[0]
        q = adj[1, i] @ support[1]
        v = adj[2, i] @ support[2]
        aw0 = jax.nn.softmax(q @ k.T, axis=-1)
        s_0 = (aw0 @ k) @ wo0.T + bo0
        aw1 = jax.nn.softmax(v @ k.T, axis=-1)
        s_1 = (aw1 @ k) @ wo1.T + bo1
        outs.append(q + v + s_0 + s_1)
    out = jax.nn.relu(jnp.stack(outs, axis=1))            # (N, B, F)
    transform = jax.nn.sigmoid(
        jnp.einsum('nbf,fo->nbo', x_nbf, wh) + bh[None, :, :])
    return out * transform + x_nbf * (1.0 - transform)


def _graph_convolution_ref(inputs_nbf, adj, p1, p2):
    x = _gcn_layer_ref(inputs_nbf, adj, p1)
    x = _gcn_layer_ref(x, adj, p2)
    return x


# ---------------- deterministic parameter init --------------------------------
def init_layer_params(key, feat):
    stdv = 1.0 / math.sqrt(feat)
    ks = jax.random.split(key, 8)
    w = jax.random.uniform(ks[0], (3, feat, feat), jnp.float32, -stdv, stdv)
    b = jax.random.uniform(ks[1], (3, 1, feat), jnp.float32, -stdv, stdv)
    lim = 1.0 / math.sqrt(feat)  # torch Linear default bound
    wo0 = jax.random.uniform(ks[2], (feat, feat), jnp.float32, -lim, lim)
    bo0 = jax.random.uniform(ks[3], (1, feat), jnp.float32, -lim, lim)
    wo1 = jax.random.uniform(ks[4], (feat, feat), jnp.float32, -lim, lim)
    bo1 = jax.random.uniform(ks[5], (1, feat), jnp.float32, -lim, lim)
    # weight_highway / bias_highway are left uninitialized by reset_parameters()
    # in the original module; we init them deterministically here.
    wh = jax.random.uniform(ks[6], (feat, feat), jnp.float32, -stdv, stdv)
    bh = jax.random.uniform(ks[7], (1, feat), jnp.float32, -stdv, stdv)
    return (w, b, wo0, bo0, wo1, bo1, wh, bh)


if __name__ == "__main__":
    N_NODES, BATCH, FEAT = 8, 2, 32   # in_features == out_features == 32

    key = jax.random.PRNGKey(0)
    k_in, k_adj, k_l1, k_l2 = jax.random.split(key, 4)

    inputs = jax.random.normal(k_in, (N_NODES, BATCH, FEAT), jnp.float32)
    adj_raw = jax.random.uniform(k_adj, (3, BATCH, N_NODES, N_NODES), jnp.float32)
    adj = adj_raw / jnp.sum(adj_raw, axis=-1, keepdims=True)  # row-normalized

    p1 = init_layer_params(k_l1, FEAT)
    p2 = init_layer_params(k_l2, FEAT)

    ref = _graph_convolution_ref(inputs, adj, p1, p2)

    # f32-MXU path: validates kernel math (only approx reciprocal differs).
    out_f32 = graph_convolution_forward(inputs, adj,
                                        pack_params(p1, p2, jnp.float32))
    out_f32 = jax.block_until_ready(out_f32)
    assert out_f32.shape == (N_NODES, BATCH, FEAT)
    assert jnp.allclose(out_f32, ref, atol=2e-2, rtol=2e-2), \
        f"f32 max abs err {jnp.max(jnp.abs(out_f32 - ref))}"

    # bf16-MXU path (performance configuration): loosened tolerance for bf16
    # matmul operands (f32 accumulation, f32 element-wise math).
    out_bf16 = graph_convolution_forward(inputs, adj,
                                         pack_params(p1, p2, jnp.bfloat16))
    out_bf16 = jax.block_until_ready(out_bf16)
    assert out_bf16.shape == (N_NODES, BATCH, FEAT)
    assert jnp.allclose(out_bf16, ref, atol=6e-2, rtol=6e-2), \
        f"bf16 max abs err {jnp.max(jnp.abs(out_bf16 - ref))}"

    print("KERNEL_OK")
</pallas_src>

<mosaic_0001>
module attributes {stable_mosaic.version = 11 : i64} {
  func.func @_gcn_fused_kernel(%arg0: memref<16x32xf32, #tpu.memory_space<vmem>>, %arg1: memref<3x16x16xf32, #tpu.memory_space<vmem>>, %arg2: memref<32x16xf32, #tpu.memory_space<vmem>>, %arg3: memref<2x4x32x32xf32, #tpu.memory_space<vmem>>, %arg4: memref<2x4x1x32xf32, #tpu.memory_space<vmem>>, %arg5: memref<2x2x32x32xf32, #tpu.memory_space<vmem>>, %arg6: memref<2x1x32xf32, #tpu.memory_space<vmem>>, %arg7: memref<16x32xf32, #tpu.memory_space<vmem>>) attributes {dimension_semantics = [], scalar_prefetch = 0 : i64, scratch_operands = 0 : i64, tpu.core_type = #tpu.core_type<tc>} {
    %c0 = arith.constant 0 : index
    %c0_0 = arith.constant 0 : index
    %0 = vector.load %arg0[%c0, %c0_0] : memref<16x32xf32, #tpu.memory_space<vmem>>, vector<16x32xf32>
    %c0_1 = arith.constant 0 : index
    %c0_2 = arith.constant 0 : index
    %1 = vector.load %arg2[%c0_1, %c0_2] : memref<32x16xf32, #tpu.memory_space<vmem>>, vector<32x16xf32>
    %c0_3 = arith.constant 0 : index
    %c0_4 = arith.constant 0 : index
    %c0_5 = arith.constant 0 : index
    %2 = vector.load %arg1[%c0_3, %c0_4, %c0_5] : memref<3x16x16xf32, #tpu.memory_space<vmem>>, vector<1x16x16xf32>
    %3 = vector.shape_cast %2 : vector<1x16x16xf32> to vector<16x16xf32>
    %c1 = arith.constant 1 : index
    %c0_6 = arith.constant 0 : index
    %c0_7 = arith.constant 0 : index
    %4 = vector.load %arg1[%c1, %c0_6, %c0_7] : memref<3x16x16xf32, #tpu.memory_space<vmem>>, vector<1x16x16xf32>
    %5 = vector.shape_cast %4 : vector<1x16x16xf32> to vector<16x16xf32>
    %c2 = arith.constant 2 : index
    %c0_8 = arith.constant 0 : index
    %c0_9 = arith.constant 0 : index
    %6 = vector.load %arg1[%c2, %c0_8, %c0_9] : memref<3x16x16xf32, #tpu.memory_space<vmem>>, vector<1x16x16xf32>
    %7 = vector.shape_cast %6 : vector<1x16x16xf32> to vector<16x16xf32>
    %c0_10 = arith.constant 0 : index
    %c0_11 = arith.constant 0 : index
    %c0_12 = arith.constant 0 : index
    %c0_13 = arith.constant 0 : index
    %8 = vector.load %arg3[%c0_10, %c0_11, %c0_12, %c0_13] : memref<2x4x32x32xf32, #tpu.memory_space<vmem>>, vector<1x1x32x32xf32>
    %9 = vector.shape_cast %8 : vector<1x1x32x32xf32> to vector<32x32xf32>
    %cst = arith.constant dense<0.000000e+00> : vector<16x32xf32>
    %10 = tpu.matmul %0, %9, %cst {dimension_numbers = #tpu.dot_dimension_numbers<[1], [0], [0], [1], [0, 0, 1, 1], [], []>} : vector<16x32xf32>, vector<32x32xf32>, vector<16x32xf32> -> vector<16x32xf32>
    %c0_14 = arith.constant 0 : index
    %c0_15 = arith.constant 0 : index
    %c0_16 = arith.constant 0 : index
    %c0_17 = arith.constant 0 : index
    %11 = vector.load %arg4[%c0_14, %c0_15, %c0_16, %c0_17] : memref<2x4x1x32xf32, #tpu.memory_space<vmem>>, vector<1x1x1x32xf32>
    %12 = vector.shape_cast %11 : vector<1x1x1x32xf32> to vector<1x32xf32>
    %13 = vector.broadcast %12 : vector<1x32xf32> to vector<16x32xf32>
    %14 = arith.addf %10, %13 : vector<16x32xf32>
    %c0_18 = arith.constant 0 : index
    %c1_19 = arith.constant 1 : index
    %c0_20 = arith.constant 0 : index
    %c0_21 = arith.constant 0 : index
    %15 = vector.load %arg3[%c0_18, %c1_19, %c0_20, %c0_21] : memref<2x4x32x32xf32, #tpu.memory_space<vmem>>, vector<1x1x32x32xf32>
    %16 = vector.shape_cast %15 : vector<1x1x32x32xf32> to vector<32x32xf32>
    %cst_22 = arith.constant dense<0.000000e+00> : vector<16x32xf32>
    %17 = tpu.matmul %0, %16, %cst_22 {dimension_numbers = #tpu.dot_dimension_numbers<[1], [0], [0], [1], [0, 0, 1, 1], [], []>} : vector<16x32xf32>, vector<32x32xf32>, vector<16x32xf32> -> vector<16x32xf32>
    %c0_23 = arith.constant 0 : index
    %c1_24 = arith.constant 1 : index
    %c0_25 = arith.constant 0 : index
    %c0_26 = arith.constant 0 : index
    %18 = vector.load %arg4[%c0_23, %c1_24, %c0_25, %c0_26] : memref<2x4x1x32xf32, #tpu.memory_space<vmem>>, vector<1x1x1x32xf32>
    %19 = vector.shape_cast %18 : vector<1x1x1x32xf32> to vector<1x32xf32>
    %20 = vector.broadcast %19 : vector<1x32xf32> to vector<16x32xf32>
    %21 = arith.addf %17, %20 : vector<16x32xf32>
    %c0_27 = arith.constant 0 : index
    %c2_28 = arith.constant 2 : index
    %c0_29 = arith.constant 0 : index
    %c0_30 = arith.constant 0 : index
    %22 = vector.load %arg3[%c0_27, %c2_28, %c0_29, %c0_30] : memref<2x4x32x32xf32, #tpu.memory_space<vmem>>, vector<1x1x32x32xf32>
    %23 = vector.shape_cast %22 : vector<1x1x32x32xf32> to vector<32x32xf32>
    %cst_31 = arith.constant dense<0.000000e+00> : vector<16x32xf32>
    %24 = tpu.matmul %0, %23, %cst_31 {dimension_numbers = #tpu.dot_dimension_numbers<[1], [0], [0], [1], [0, 0, 1, 1], [], []>} : vector<16x32xf32>, vector<32x32xf32>, vector<16x32xf32> -> vector<16x32xf32>
    %c0_32 = arith.constant 0 : index
    %c2_33 = arith.constant 2 : index
    %c0_34 = arith.constant 0 : index
    %c0_35 = arith.constant 0 : index
    %25 = vector.load %arg4[%c0_32, %c2_33, %c0_34, %c0_35] : memref<2x4x1x32xf32, #tpu.memory_space<vmem>>, vector<1x1x1x32xf32>
    %26 = vector.shape_cast %25 : vector<1x1x1x32xf32> to vector<1x32xf32>
    %27 = vector.broadcast %26 : vector<1x32xf32> to vector<16x32xf32>
    %28 = arith.addf %24, %27 : vector<16x32xf32>
    %c0_36 = arith.constant 0 : index
    %c3 = arith.constant 3 : index
    %c0_37 = arith.constant 0 : index
    %c0_38 = arith.constant 0 : index
    %29 = vector.load %arg3[%c0_36, %c3, %c0_37, %c0_38] : memref<2x4x32x32xf32, #tpu.memory_space<vmem>>, vector<1x1x32x32xf32>
    %30 = vector.shape_cast %29 : vector<1x1x32x32xf32> to vector<32x32xf32>
    %cst_39 = arith.constant dense<0.000000e+00> : vector<16x32xf32>
    %31 = tpu.matmul %0, %30, %cst_39 {dimension_numbers = #tpu.dot_dimension_numbers<[1], [0], [0], [1], [0, 0, 1, 1], [], []>} : vector<16x32xf32>, vector<32x32xf32>, vector<16x32xf32> -> vector<16x32xf32>
    %c0_40 = arith.constant 0 : index
    %c3_41 = arith.constant 3 : index
    %c0_42 = arith.constant 0 : index
    %c0_43 = arith.constant 0 : index
    %32 = vector.load %arg4[%c0_40, %c3_41, %c0_42, %c0_43] : memref<2x4x1x32xf32, #tpu.memory_space<vmem>>, vector<1x1x1x32xf32>
    %33 = vector.shape_cast %32 : vector<1x1x1x32xf32> to vector<1x32xf32>
    %34 = vector.broadcast %33 : vector<1x32xf32> to vector<16x32xf32>
    %35 = arith.addf %31, %34 : vector<16x32xf32>
    %cst_44 = arith.constant dense<0.000000e+00> : vector<16x32xf32>
    %36 = tpu.matmul %3, %14, %cst_44 {dimension_numbers = #tpu.dot_dimension_numbers<[1], [0], [0], [1], [0, 0, 1, 1], [], []>} : vector<16x16xf32>, vector<16x32xf32>, vector<16x32xf32> -> vector<16x32xf32>
    %cst_45 = arith.constant dense<0.000000e+00> : vector<16x32xf32>
    %37 = tpu.matmul %5, %21, %cst_45 {dimension_numbers = #tpu.dot_dimension_numbers<[1], [0], [0], [1], [0, 0, 1, 1], [], []>} : vector<16x16xf32>, vector<16x32xf32>, vector<16x32xf32> -> vector<16x32xf32>
    %cst_46 = arith.constant dense<0.000000e+00> : vector<16x32xf32>
    %38 = tpu.matmul %7, %28, %cst_46 {dimension_numbers = #tpu.dot_dimension_numbers<[1], [0], [0], [1], [0, 0, 1, 1], [], []>} : vector<16x16xf32>, vector<16x32xf32>, vector<16x32xf32> -> vector<16x32xf32>
    %39 = tpu.concatenate %37, %38 in 0 : vector<16x32xf32>, vector<16x32xf32> -> vector<32x32xf32>
    %cst_47 = arith.constant dense<0.000000e+00> : vector<32x16xf32>
    %40 = tpu.matmul %39, %36, %cst_47 {dimension_numbers = #tpu.dot_dimension_numbers<[1], [1], [0], [0], [0, 0, 1, 0], [], []>} : vector<32x32xf32>, vector<16x32xf32>, vector<32x16xf32> -> vector<32x16xf32>
    %41 = arith.addf %40, %1 : vector<32x16xf32>
    %cst_48 = arith.constant dense<0xFF800000> : vector<32xf32>
    %42 = vector.multi_reduction <maximumf>, %41, %cst_48 [1] : vector<32x16xf32> to vector<32xf32>
    %43 = vector.shape_cast %42 : vector<32xf32> to vector<32x1xf32>
    %44 = vector.broadcast %43 : vector<32x1xf32> to vector<32x16xf32>
    %45 = arith.subf %41, %44 : vector<32x16xf32>
    %46 = math.exp %45 : vector<32x16xf32>
    %cst_49 = arith.constant dense<0.000000e+00> : vector<32xf32>
    %47 = vector.multi_reduction <add>, %46, %cst_49 [1] : vector<32x16xf32> to vector<32xf32>
    %48 = vector.shape_cast %47 : vector<32xf32> to vector<32x1xf32>
    %49 = tpu.reciprocal %48 {approx = true} : vector<32x1xf32> -> vector<32x1xf32>
    %50 = vector.broadcast %49 : vector<32x1xf32> to vector<32x16xf32>
    %51 = arith.mulf %46, %50 : vector<32x16xf32>
    %cst_50 = arith.constant dense<0.000000e+00> : vector<32x32xf32>
    %52 = tpu.matmul %51, %36, %cst_50 {dimension_numbers = #tpu.dot_dimension_numbers<[1], [0], [0], [1], [0, 0, 1, 1], [], []>} : vector<32x16xf32>, vector<16x32xf32>, vector<32x32xf32> -> vector<32x32xf32>
    %53 = vector.extract_strided_slice %52 {offsets = [0, 0], sizes = [16, 32], strides = [1, 1]} : vector<32x32xf32> to vector<16x32xf32>
    %c0_51 = arith.constant 0 : index
    %c0_52 = arith.constant 0 : index
    %c0_53 = arith.constant 0 : index
    %c0_54 = arith.constant 0 : index
    %54 = vector.load %arg5[%c0_51, %c0_52, %c0_53, %c0_54] : memref<2x2x32x32xf32, #tpu.memory_space<vmem>>, vector<1x1x32x32xf32>
    %55 = vector.shape_cast %54 : vector<1x1x32x32xf32> to vector<32x32xf32>
    %cst_55 = arith.constant dense<0.000000e+00> : vector<16x32xf32>
    %56 = tpu.matmul %53, %55, %cst_55 {dimension_numbers = #tpu.dot_dimension_numbers<[1], [0], [0], [1], [0, 0, 1, 1], [], []>} : vector<16x32xf32>, vector<32x32xf32>, vector<16x32xf32> -> vector<16x32xf32>
    %57 = vector.extract_strided_slice %52 {offsets = [16, 0], sizes = [16, 32], strides = [1, 1]} : vector<32x32xf32> to vector<16x32xf32>
    %c0_56 = arith.constant 0 : index
    %c1_57 = arith.constant 1 : index
    %c0_58 = arith.constant 0 : index
    %c0_59 = arith.constant 0 : index
    %58 = vector.load %arg5[%c0_56, %c1_57, %c0_58, %c0_59] : memref<2x2x32x32xf32, #tpu.memory_space<vmem>>, vector<1x1x32x32xf32>
    %59 = vector.shape_cast %58 : vector<1x1x32x32xf32> to vector<32x32xf32>
    %cst_60 = arith.constant dense<0.000000e+00> : vector<16x32xf32>
    %60 = tpu.matmul %57, %59, %cst_60 {dimension_numbers = #tpu.dot_dimension_numbers<[1], [0], [0], [1], [0, 0, 1, 1], [], []>} : vector<16x32xf32>, vector<32x32xf32>, vector<16x32xf32> -> vector<16x32xf32>
    %61 = arith.addf %56, %60 : vector<16x32xf32>
    %c0_61 = arith.constant 0 : index
    %c0_62 = arith.constant 0 : index
    %c0_63 = arith.constant 0 : index
    %62 = vector.load %arg6[%c0_61, %c0_62, %c0_63] : memref<2x1x32xf32, #tpu.memory_space<vmem>>, vector<1x1x32xf32>
    %63 = vector.shape_cast %62 : vector<1x1x32xf32> to vector<1x32xf32>
    %64 = vector.broadcast %63 : vector<1x32xf32> to vector<16x32xf32>
    %65 = arith.addf %61, %64 : vector<16x32xf32>
    %66 = arith.addf %37, %38 : vector<16x32xf32>
    %67 = arith.addf %66, %65 : vector<16x32xf32>
    %cst_64 = arith.constant 0.000000e+00 : f32
    %68 = vector.broadcast %cst_64 : f32 to vector<16x32xf32>
    %69 = arith.maximumf %67, %68 : vector<16x32xf32>
    %70 = arith.negf %35 : vector<16x32xf32>
    %71 = math.exp %70 : vector<16x32xf32>
    %cst_65 = arith.constant 1.000000e+00 : f32
    %72 = vector.broadcast %cst_65 : f32 to vector<16x32xf32>
    %73 = arith.addf %72, %71 : vector<16x32xf32>
    %74 = arith.divf %72, %73 : vector<16x32xf32>
    %75 = arith.mulf %69, %74 : vector<16x32xf32>
    %cst_66 = arith.constant 1.000000e+00 : f32
    %76 = vector.broadcast %cst_66 : f32 to vector<16x32xf32>
    %77 = arith.subf %76, %74 : vector<16x32xf32>
    %78 = arith.mulf %0, %77 : vector<16x32xf32>
    %79 = arith.addf %75, %78 : vector<16x32xf32>
    %c1_67 = arith.constant 1 : index
    %c0_68 = arith.constant 0 : index
    %c0_69 = arith.constant 0 : index
    %c0_70 = arith.constant 0 : index
    %80 = vector.load %arg3[%c1_67, %c0_68, %c0_69, %c0_70] : memref<2x4x32x32xf32, #tpu.memory_space<vmem>>, vector<1x1x32x32xf32>
    %81 = vector.shape_cast %80 : vector<1x1x32x32xf32> to vector<32x32xf32>
    %cst_71 = arith.constant dense<0.000000e+00> : vector<16x32xf32>
    %82 = tpu.matmul %79, %81, %cst_71 {dimension_numbers = #tpu.dot_dimension_numbers<[1], [0], [0], [1], [0, 0, 1, 1], [], []>} : vector<16x32xf32>, vector<32x32xf32>, vector<16x32xf32> -> vector<16x32xf32>
    %c1_72 = arith.constant 1 : index
    %c0_73 = arith.constant 0 : index
    %c0_74 = arith.constant 0 : index
    %c0_75 = arith.constant 0 : index
    %83 = vector.load %arg4[%c1_72, %c0_73, %c0_74, %c0_75] : memref<2x4x1x32xf32, #tpu.memory_space<vmem>>, vector<1x1x1x32xf32>
    %84 = vector.shape_cast %83 : vector<1x1x1x32xf32> to vector<1x32xf32>
    %85 = vector.broadcast %84 : vector<1x32xf32> to vector<16x32xf32>
    %86 = arith.addf %82, %85 : vector<16x32xf32>
    %c1_76 = arith.constant 1 : index
    %c1_77 = arith.constant 1 : index
    %c0_78 = arith.constant 0 : index
    %c0_79 = arith.constant 0 : index
    %87 = vector.load %arg3[%c1_76, %c1_77, %c0_78, %c0_79] : memref<2x4x32x32xf32, #tpu.memory_space<vmem>>, vector<1x1x32x32xf32>
    %88 = vector.shape_cast %87 : vector<1x1x32x32xf32> to vector<32x32xf32>
    %cst_80 = arith.constant dense<0.000000e+00> : vector<16x32xf32>
    %89 = tpu.matmul %79, %88, %cst_80 {dimension_numbers = #tpu.dot_dimension_numbers<[1], [0], [0], [1], [0, 0, 1, 1], [], []>} : vector<16x32xf32>, vector<32x32xf32>, vector<16x32xf32> -> vector<16x32xf32>
    %c1_81 = arith.constant 1 : index
    %c1_82 = arith.constant 1 : index
    %c0_83 = arith.constant 0 : index
    %c0_84 = arith.constant 0 : index
    %90 = vector.load %arg4[%c1_81, %c1_82, %c0_83, %c0_84] : memref<2x4x1x32xf32, #tpu.memory_space<vmem>>, vector<1x1x1x32xf32>
    %91 = vector.shape_cast %90 : vector<1x1x1x32xf32> to vector<1x32xf32>
    %92 = vector.broadcast %91 : vector<1x32xf32> to vector<16x32xf32>
    %93 = arith.addf %89, %92 : vector<16x32xf32>
    %c1_85 = arith.constant 1 : index
    %c2_86 = arith.constant 2 : index
    %c0_87 = arith.constant 0 : index
    %c0_88 = arith.constant 0 : index
    %94 = vector.load %arg3[%c1_85, %c2_86, %c0_87, %c0_88] : memref<2x4x32x32xf32, #tpu.memory_space<vmem>>, vector<1x1x32x32xf32>
    %95 = vector.shape_cast %94 : vector<1x1x32x32xf32> to vector<32x32xf32>
    %cst_89 = arith.constant dense<0.000000e+00> : vector<16x32xf32>
    %96 = tpu.matmul %79, %95, %cst_89 {dimension_numbers = #tpu.dot_dimension_numbers<[1], [0], [0], [1], [0, 0, 1, 1], [], []>} : vector<16x32xf32>, vector<32x32xf32>, vector<16x32xf32> -> vector<16x32xf32>
    %c1_90 = arith.constant 1 : index
    %c2_91 = arith.constant 2 : index
    %c0_92 = arith.constant 0 : index
    %c0_93 = arith.constant 0 : index
    %97 = vector.load %arg4[%c1_90, %c2_91, %c0_92, %c0_93] : memref<2x4x1x32xf32, #tpu.memory_space<vmem>>, vector<1x1x1x32xf32>
    %98 = vector.shape_cast %97 : vector<1x1x1x32xf32> to vector<1x32xf32>
    %99 = vector.broadcast %98 : vector<1x32xf32> to vector<16x32xf32>
    %100 = arith.addf %96, %99 : vector<16x32xf32>
    %c1_94 = arith.constant 1 : index
    %c3_95 = arith.constant 3 : index
    %c0_96 = arith.constant 0 : index
    %c0_97 = arith.constant 0 : index
    %101 = vector.load %arg3[%c1_94, %c3_95, %c0_96, %c0_97] : memref<2x4x32x32xf32, #tpu.memory_space<vmem>>, vector<1x1x32x32xf32>
    %102 = vector.shape_cast %101 : vector<1x1x32x32xf32> to vector<32x32xf32>
    %cst_98 = arith.constant dense<0.000000e+00> : vector<16x32xf32>
    %103 = tpu.matmul %79, %102, %cst_98 {dimension_numbers = #tpu.dot_dimension_numbers<[1], [0], [0], [1], [0, 0, 1, 1], [], []>} : vector<16x32xf32>, vector<32x32xf32>, vector<16x32xf32> -> vector<16x32xf32>
    %c1_99 = arith.constant 1 : index
    %c3_100 = arith.constant 3 : index
    %c0_101 = arith.constant 0 : index
    %c0_102 = arith.constant 0 : index
    %104 = vector.load %arg4[%c1_99, %c3_100, %c0_101, %c0_102] : memref<2x4x1x32xf32, #tpu.memory_space<vmem>>, vector<1x1x1x32xf32>
    %105 = vector.shape_cast %104 : vector<1x1x1x32xf32> to vector<1x32xf32>
    %106 = vector.broadcast %105 : vector<1x32xf32> to vector<16x32xf32>
    %107 = arith.addf %103, %106 : vector<16x32xf32>
    %cst_103 = arith.constant dense<0.000000e+00> : vector<16x32xf32>
    %108 = tpu.matmul %3, %86, %cst_103 {dimension_numbers = #tpu.dot_dimension_numbers<[1], [0], [0], [1], [0, 0, 1, 1], [], []>} : vector<16x16xf32>, vector<16x32xf32>, vector<16x32xf32> -> vector<16x32xf32>
    %cst_104 = arith.constant dense<0.000000e+00> : vector<16x32xf32>
    %109 = tpu.matmul %5, %93, %cst_104 {dimension_numbers = #tpu.dot_dimension_numbers<[1], [0], [0], [1], [0, 0, 1, 1], [], []>} : vector<16x16xf32>, vector<16x32xf32>, vector<16x32xf32> -> vector<16x32xf32>
    %cst_105 = arith.constant dense<0.000000e+00> : vector<16x32xf32>
    %110 = tpu.matmul %7, %100, %cst_105 {dimension_numbers = #tpu.dot_dimension_numbers<[1], [0], [0], [1], [0, 0, 1, 1], [], []>} : vector<16x16xf32>, vector<16x32xf32>, vector<16x32xf32> -> vector<16x32xf32>
    %111 = tpu.concatenate %109, %110 in 0 : vector<16x32xf32>, vector<16x32xf32> -> vector<32x32xf32>
    %cst_106 = arith.constant dense<0.000000e+00> : vector<32x16xf32>
    %112 = tpu.matmul %111, %108, %cst_106 {dimension_numbers = #tpu.dot_dimension_numbers<[1], [1], [0], [0], [0, 0, 1, 0], [], []>} : vector<32x32xf32>, vector<16x32xf32>, vector<32x16xf32> -> vector<32x16xf32>
    %113 = arith.addf %112, %1 : vector<32x16xf32>
    %cst_107 = arith.constant dense<0xFF800000> : vector<32xf32>
    %114 = vector.multi_reduction <maximumf>, %113, %cst_107 [1] : vector<32x16xf32> to vector<32xf32>
    %115 = vector.shape_cast %114 : vector<32xf32> to vector<32x1xf32>
    %116 = vector.broadcast %115 : vector<32x1xf32> to vector<32x16xf32>
    %117 = arith.subf %113, %116 : vector<32x16xf32>
    %118 = math.exp %117 : vector<32x16xf32>
    %cst_108 = arith.constant dense<0.000000e+00> : vector<32xf32>
    %119 = vector.multi_reduction <add>, %118, %cst_108 [1] : vector<32x16xf32> to vector<32xf32>
    %120 = vector.shape_cast %119 : vector<32xf32> to vector<32x1xf32>
    %121 = tpu.reciprocal %120 {approx = true} : vector<32x1xf32> -> vector<32x1xf32>
    %122 = vector.broadcast %121 : vector<32x1xf32> to vector<32x16xf32>
    %123 = arith.mulf %118, %122 : vector<32x16xf32>
    %cst_109 = arith.constant dense<0.000000e+00> : vector<32x32xf32>
    %124 = tpu.matmul %123, %108, %cst_109 {dimension_numbers = #tpu.dot_dimension_numbers<[1], [0], [0], [1], [0, 0, 1, 1], [], []>} : vector<32x16xf32>, vector<16x32xf32>, vector<32x32xf32> -> vector<32x32xf32>
    %125 = vector.extract_strided_slice %124 {offsets = [0, 0], sizes = [16, 32], strides = [1, 1]} : vector<32x32xf32> to vector<16x32xf32>
    %c1_110 = arith.constant 1 : index
    %c0_111 = arith.constant 0 : index
    %c0_112 = arith.constant 0 : index
    %c0_113 = arith.constant 0 : index
    %126 = vector.load %arg5[%c1_110, %c0_111, %c0_112, %c0_113] : memref<2x2x32x32xf32, #tpu.memory_space<vmem>>, vector<1x1x32x32xf32>
    %127 = vector.shape_cast %126 : vector<1x1x32x32xf32> to vector<32x32xf32>
    %cst_114 = arith.constant dense<0.000000e+00> : vector<16x32xf32>
    %128 = tpu.matmul %125, %127, %cst_114 {dimension_numbers = #tpu.dot_dimension_numbers<[1], [0], [0], [1], [0, 0, 1, 1], [], []>} : vector<16x32xf32>, vector<32x32xf32>, vector<16x32xf32> -> vector<16x32xf32>
    %129 = vector.extract_strided_slice %124 {offsets = [16, 0], sizes = [16, 32], strides = [1, 1]} : vector<32x32xf32> to vector<16x32xf32>
    %c1_115 = arith.constant 1 : index
    %c1_116 = arith.constant 1 : index
    %c0_117 = arith.constant 0 : index
    %c0_118 = arith.constant 0 : index
    %130 = vector.load %arg5[%c1_115, %c1_116, %c0_117, %c0_118] : memref<2x2x32x32xf32, #tpu.memory_space<vmem>>, vector<1x1x32x32xf32>
    %131 = vector.shape_cast %130 : vector<1x1x32x32xf32> to vector<32x32xf32>
    %cst_119 = arith.constant dense<0.000000e+00> : vector<16x32xf32>
    %132 = tpu.matmul %129, %131, %cst_119 {dimension_numbers = #tpu.dot_dimension_numbers<[1], [0], [0], [1], [0, 0, 1, 1], [], []>} : vector<16x32xf32>, vector<32x32xf32>, vector<16x32xf32> -> vector<16x32xf32>
    %133 = arith.addf %128, %132 : vector<16x32xf32>
    %c1_120 = arith.constant 1 : index
    %c0_121 = arith.constant 0 : index
    %c0_122 = arith.constant 0 : index
    %134 = vector.load %arg6[%c1_120, %c0_121, %c0_122] : memref<2x1x32xf32, #tpu.memory_space<vmem>>, vector<1x1x32xf32>
    %135 = vector.shape_cast %134 : vector<1x1x32xf32> to vector<1x32xf32>
    %136 = vector.broadcast %135 : vector<1x32xf32> to vector<16x32xf32>
    %137 = arith.addf %133, %136 : vector<16x32xf32>
    %138 = arith.addf %109, %110 : vector<16x32xf32>
    %139 = arith.addf %138, %137 : vector<16x32xf32>
    %cst_123 = arith.constant 0.000000e+00 : f32
    %140 = vector.broadcast %cst_123 : f32 to vector<16x32xf32>
    %141 = arith.maximumf %139, %140 : vector<16x32xf32>
    %142 = arith.negf %107 : vector<16x32xf32>
    %143 = math.exp %142 : vector<16x32xf32>
    %cst_124 = arith.constant 1.000000e+00 : f32
    %144 = vector.broadcast %cst_124 : f32 to vector<16x32xf32>
    %145 = arith.addf %144, %143 : vector<16x32xf32>
    %146 = arith.divf %144, %145 : vector<16x32xf32>
    %147 = arith.mulf %141, %146 : vector<16x32xf32>
    %cst_125 = arith.constant 1.000000e+00 : f32
    %148 = vector.broadcast %cst_125 : f32 to vector<16x32xf32>
    %149 = arith.subf %148, %146 : vector<16x32xf32>
    %150 = arith.mulf %79, %149 : vector<16x32xf32>
    %151 = arith.addf %147, %150 : vector<16x32xf32>
    %c0_126 = arith.constant 0 : index
    %c0_127 = arith.constant 0 : index
    %152 = vector.load %arg7[%c0_126, %c0_127] : memref<16x32xf32, #tpu.memory_space<vmem>>, vector<16x32xf32>
    tpu.vector_store %arg7[%c0_126, %c0_127], %151 {strides = array<i32>} : memref<16x32xf32, #tpu.memory_space<vmem>>, vector<16x32xf32>,
    return
  }
}

</mosaic_0001>

<llo_original>
// kernel: tpu_custom_call.1
$region0: #{tpu_custom_call.1}
  #allocation0 [shape = 'u32[]', space=smem, size = 0x4, offset = 0x4, fixed_abs, tag = 'smem constant byte address 0x4 - core index']
  #allocation1 [shape = 'u32[144,128]{1,0:T(1,128)}', space=vmem, size = 0x12000, scoped, tag = 'internal scratch']
  %s0 = inlined_call_operand.hbm [shape: f32[16,32], index: 0, kind: input, shape index: {}]
  %s1 = inlined_call_operand.vmem [shape: f32[3,16,16], index: 1, kind: input, shape index: {}]
  %s2 = inlined_call_operand.vmem [shape: f32[32,16], index: 2, kind: input, shape index: {}]
  %s3 = inlined_call_operand.hbm [shape: f32[2,4,32,32], index: 3, kind: input, shape index: {}]
  %s4 = inlined_call_operand.hbm [shape: f32[2,4,1,32], index: 4, kind: input, shape index: {}]
  %s5 = inlined_call_operand.hbm [shape: f32[2,2,32,32], index: 5, kind: input, shape index: {}]
  %s6 = inlined_call_operand.vmem [shape: f32[2,1,32], index: 6, kind: input, shape index: {}]
  %s7 = inlined_call_operand.hbm [shape: f32[16,32], index: 7, kind: output, shape index: {}]
  %s8 = sld [smem:[#allocation0]]
  $region54: #{tpu_custom_call.1} parent=0
    _
  %s10 = ssub.s32 1, %s8
  %s11 = scalar_select 0, %s10, %s8
  $region1: #{tpu_custom_call.1} parent=0
    #allocation2 [shape = 'u8[8192]{0}', space=vmem, size = 0x2000, scoped, tag = 'input window, operand 0, single buffered']
    #allocation3 [shape = 's32[1]{0}', space=sflag, size = 0x4, scoped, tag = 'scoped memory for tpu_custom_call.1']
    #allocation4 [shape = 's32[1]{0}', space=sflag, size = 0x4, scoped, tag = 'scoped memory for tpu_custom_call.1']
    #allocation5 [shape = 'u8[131072]{0}', space=vmem, size = 0x20000, scoped, tag = 'input window, operand 3, single buffered']
    #allocation6 [shape = 's32[1]{0}', space=sflag, size = 0x4, scoped, tag = 'scoped memory for tpu_custom_call.1']
    #allocation7 [shape = 'u8[4096]{0}', space=vmem, size = 0x1000, scoped, tag = 'input window, operand 4, single buffered']
    #allocation8 [shape = 'u8[65536]{0}', space=vmem, size = 0x10000, scoped, tag = 'input window, operand 5, single buffered']
    #allocation9 [shape = 's32[1]{0}', space=sflag, size = 0x4, scoped, tag = 'scoped memory for tpu_custom_call.1']
    #allocation10 [shape = 'u8[8192]{0}', space=vmem, size = 0x2000, scoped, tag = 'output window, operand 0, single buffered']
    %12 = vsyncpa [#allocation3], 0
    %13 = vsyncpa [#allocation6], 0
    %14 = vsyncpa [#allocation9], 0
    %15 = vsyncpa [#allocation4], 0
    // Predicated region
    $region2: #{tpu_custom_call.1} parent=1 // pred_check
      _
    $region3: #{tpu_custom_call.1} parent=1 // pred_check_branch
      %17 = sbr.rel (0) target = $region5
    $region4: #{tpu_custom_call.1} parent=1 // pred_region
      %s19 = ssub.s32 256, 256
      %20 = vsyncadd [#allocation3], %s19
      %s21 = sshll.u32 [#allocation2], 4
      %s22 = int_to_ptr.vmem [resolvable:$true] %s21
      %27 = dma.hbm_to_vmem [thread:$0]  %s0, 256, %s22, [#allocation3], 128, 128, 8
    $region5: #{tpu_custom_call.1} parent=1 // pred_fallthru
      _
    // Predicated region
    $region6: #{tpu_custom_call.1} parent=1 // pred_check
      _
    $region7: #{tpu_custom_call.1} parent=1 // pred_check_branch
      %29 = sbr.rel (0) target = $region9
    $region8: #{tpu_custom_call.1} parent=1 // pred_region
      _
    $region9: #{tpu_custom_call.1} parent=1 // pred_fallthru
      _
    // Predicated region
    $region10: #{tpu_custom_call.1} parent=1 // pred_check
      _
    $region11: #{tpu_custom_call.1} parent=1 // pred_check_branch
      %31 = sbr.rel (0) target = $region13
    $region12: #{tpu_custom_call.1} parent=1 // pred_region
      _
    $region13: #{tpu_custom_call.1} parent=1 // pred_fallthru
      _
    // Predicated region
    $region14: #{tpu_custom_call.1} parent=1 // pred_check
      _
    $region15: #{tpu_custom_call.1} parent=1 // pred_check_branch
      %33 = sbr.rel (0) target = $region17
    $region16: #{tpu_custom_call.1} parent=1 // pred_region
      %s35 = ssub.s32 4096, 4096
      %36 = vsyncadd [#allocation6], %s35
      %s37 = sshll.u32 [#allocation5], 4
      %s38 = int_to_ptr.vmem [resolvable:$true] %s37
      %43 = dma.hbm_to_vmem [thread:$0]  %s3, 4096, %s38, [#allocation6], 128, 128, 8
    $region17: #{tpu_custom_call.1} parent=1 // pred_fallthru
      _
    // Predicated region
    $region18: #{tpu_custom_call.1} parent=1 // pred_check
      _
    $region19: #{tpu_custom_call.1} parent=1 // pred_check_branch
      %45 = sbr.rel (0) target = $region21
    $region20: #{tpu_custom_call.1} parent=1 // pred_region
      %s47 = ssub.s32 128, 128
      %48 = vsyncadd [#allocation6], %s47
      %s49 = sshll.u32 [#allocation7], 4
      %s50 = int_to_ptr.vmem [resolvable:$true] %s49
      %55 = dma.hbm_to_vmem [thread:$0]  %s4, 128, %s50, [#allocation6], 16, 16, 1
    $region21: #{tpu_custom_call.1} parent=1 // pred_fallthru
      _
    // Predicated region
    $region22: #{tpu_custom_call.1} parent=1 // pred_check
      _
    $region23: #{tpu_custom_call.1} parent=1 // pred_check_branch
      %57 = sbr.rel (0) target = $region25
    $region24: #{tpu_custom_call.1} parent=1 // pred_region
      %s59 = ssub.s32 2048, 2048
      %60 = vsyncadd [#allocation9], %s59
      %s61 = sshll.u32 [#allocation8], 4
      %s62 = int_to_ptr.vmem [resolvable:$true] %s61
      %67 = dma.hbm_to_vmem [thread:$0]  %s5, 2048, %s62, [#allocation9], 128, 128, 8
    $region25: #{tpu_custom_call.1} parent=1 // pred_fallthru
      _
    // Predicated region
    $region26: #{tpu_custom_call.1} parent=1 // pred_check
      _
    $region27: #{tpu_custom_call.1} parent=1 // pred_check_branch
      %69 = sbr.rel (0) target = $region29
    $region28: #{tpu_custom_call.1} parent=1 // pred_region
      _
    $region29: #{tpu_custom_call.1} parent=1 // pred_fallthru
      _
    // Predicated region
    $region30: #{tpu_custom_call.1} parent=1 // pred_check
      _
    $region31: #{tpu_custom_call.1} parent=1 // pred_check_branch
      %71 = sbr.rel (0) target = $region33
    $region32: #{tpu_custom_call.1} parent=1 // pred_region
      %72 = dma.done [#allocation3], 256
    $region33: #{tpu_custom_call.1} parent=1 // pred_fallthru
      _
    // Predicated region
    $region34: #{tpu_custom_call.1} parent=1 // pred_check
      _
    $region35: #{tpu_custom_call.1} parent=1 // pred_check_branch
      %74 = sbr.rel (0) target = $region37
    $region36: #{tpu_custom_call.1} parent=1 // pred_region
      %75 = dma.done [#allocation6], 4096
    $region37: #{tpu_custom_call.1} parent=1 // pred_fallthru
      _
    // Predicated region
    $region38: #{tpu_custom_call.1} parent=1 // pred_check
      _
    $region39: #{tpu_custom_call.1} parent=1 // pred_check_branch
      %77 = sbr.rel (0) target = $region41
    $region40: #{tpu_custom_call.1} parent=1 // pred_region
      %78 = dma.done [#allocation6], 128
    $region41: #{tpu_custom_call.1} parent=1 // pred_fallthru
      _
    // Predicated region
    $region42: #{tpu_custom_call.1} parent=1 // pred_check
      _
    $region43: #{tpu_custom_call.1} parent=1 // pred_check_branch
      %80 = sbr.rel (0) target = $region45
    $region44: #{tpu_custom_call.1} parent=1 // pred_region
      %81 = dma.done [#allocation9], 2048
    $region45: #{tpu_custom_call.1} parent=1 // pred_fallthru
      _
    %v82 = vld [vmem:[#allocation2] sm:$0xff]
    %v83 = vld [vmem:[#allocation2 + $0x8] sm:$0xff]
    %v84 = vld [vmem:[%s2] sm:$0xff]
    %v85 = vld [vmem:[%s2 + $0x8] sm:$0xff]
    %v86 = vld [vmem:[%s2 + $0x10] sm:$0xff]
    %v87 = vld [vmem:[%s2 + $0x18] sm:$0xff]
    %v88 = vld [vmem:[%s1] sm:$0xff]
    %v89 = vld [vmem:[%s1 + $0x8] sm:$0xff]
    %s90 = scalar_lea.vmem %s1, 16
    %v91 = vld [vmem:[%s90] sm:$0xff]
    %v92 = vld [vmem:[%s90 + $0x8] sm:$0xff]
    %s93 = scalar_lea.vmem %s1, 32
    %v94 = vld [vmem:[%s93] sm:$0xff]
    %v95 = vld [vmem:[%s93 + $0x8] sm:$0xff]
    %v96 = vld [vmem:[#allocation5] sm:$0xff]
    %v97 = vld [vmem:[#allocation5 + $0x8] sm:$0xff]
    %v98 = vld [vmem:[#allocation5 + $0x10] sm:$0xff]
    %v99 = vld [vmem:[#allocation5 + $0x18] sm:$0xff]
    %v100 = vld [vmem:[#allocation7] sm:$0x1]
    %v102 = vlaneseq
    %v103 = vshrl.u32 %v102, 7
    %v104 = vsub.s32 0, %v103
    %v105 = vrot.slane %v100, %v104
    %vm107 = vcmask 261120
    %v109 = vsel %vm107, %v82, 0
    %v112 = vsel %vm107, %v83, 0
    %114 = vmatprep.subr.mxu0 0.0
    %115 = vmatpush1.msra.mxu0 0.0
    %116 = vmatprep.subr.mxu0 0.0
    %117 = vmatpush1.msra.mxu0 0.0
    %118 = vmatprep.subr.mxu0 0.0
    %119 = vmatpush1.msra.mxu0 0.0
    %120 = vmatprep.subr.mxu0 0.0
    %121 = vmatpush1.msra.mxu0 0.0
    %122 = vmatprep.subr.mxu0 0.0
    %123 = vmatpush1.msra.mxu0 0.0
    %124 = vmatprep.subr.mxu0 0.0
    %125 = vmatpush1.msra.mxu0 0.0
    %126 = vmatprep.subr.mxu0 0.0
    %127 = vmatpush1.msra.mxu0 0.0
    %128 = vmatprep.subr.mxu0 0.0
    %129 = vmatpush1.msra.mxu0 0.0
    %130 = vmatprep.subr.mxu0 0.0
    %131 = vmatpush1.msra.mxu0 0.0
    %132 = vmatprep.subr.mxu0 0.0
    %133 = vmatpush1.msra.mxu0 0.0
    %134 = vmatprep.subr.mxu0 0.0
    %135 = vmatpush1.msra.mxu0 0.0
    %136 = vmatprep.subr.mxu0 0.0
    %137 = vmatpush1.msra.mxu0 0.0
    %138 = vmatprep.subr.mxu0 0.0
    %139 = vmatpush1.msra.mxu0 %v99
    %140 = vmatprep.subr.mxu0 0.0
    %141 = vmatpush1.msra.mxu0 %v98
    %142 = vmatprep.subr.mxu0 0.0
    %143 = vmatpush1.msra.mxu0 %v97
    %144 = vmatprep.subr.mxu0 0.0
    %145 = vmatpush1.msra.mxu0 %v96
    %146 = vmatprep.subr.mxu0 0.0
    %147 = vmatpush2.msra.mxu0 0.0
    %148 = vmatprep.subr.mxu0 0.0
    %149 = vmatpush2.msra.mxu0 0.0
    %150 = vmatprep.subr.mxu0 0.0
    %151 = vmatpush2.msra.mxu0 0.0
    %152 = vmatprep.subr.mxu0 0.0
    %153 = vmatpush2.msra.mxu0 0.0
    %154 = vmatprep.subr.mxu0 0.0
    %155 = vmatpush2.msra.mxu0 0.0
    %156 = vmatprep.subr.mxu0 0.0
    %157 = vmatpush2.msra.mxu0 0.0
    %158 = vmatprep.subr.mxu0 0.0
    %159 = vmatpush2.msra.mxu0 0.0
    %160 = vmatprep.subr.mxu0 0.0
    %161 = vmatpush2.msra.mxu0 0.0
    %162 = vmatprep.subr.mxu0 0.0
    %163 = vmatpush2.msra.mxu0 0.0
    %164 = vmatprep.subr.mxu0 0.0
    %165 = vmatpush2.msra.mxu0 0.0
    %166 = vmatprep.subr.mxu0 0.0
    %167 = vmatpush2.msra.mxu0 0.0
    %168 = vmatprep.subr.mxu0 0.0
    %169 = vmatpush2.msra.mxu0 0.0
    %170 = vmatprep.subr.mxu0 0.0
    %171 = vmatpush2.msra.mxu0 0.0
    %172 = vmatprep.subr.mxu0 0.0
    %173 = vmatpush2.msra.mxu0 0.0
    %174 = vmatprep.subr.mxu0 0.0
    %175 = vmatpush2.msra.mxu0 0.0
    %176 = vmatprep.subr.mxu0 0.0
    %177 = vmatpush2.msra.mxu0 0.0
    %178 = vmatprep.mubr.f32.mxu0 0.0
    %179 = vmatmul.mubr.f32.gmra.mxu0 %v109
    %v180 = vpop.f32.mrf.mxu0
    %v181 = vadd.f32 %v105, %v180
    %v182 = vpop.f32.mrf.mxu0
    %183 = vmatprep.mubr.f32.mxu0 0.0
    %184 = vmatmul.mubr.f32.gmra.mxu0 %v112
    %v185 = vpop.f32.mrf.mxu0
    %v186 = vadd.f32 %v105, %v185
    %v187 = vpop.f32.mrf.mxu0
    %188 = vdwg.mxu0
    %s189 = scalar_lea.vmem [#allocation5], 32
    %v190 = vld [vmem:[%s189] sm:$0xff]
    %v191 = vld [vmem:[%s189 + $0x8] sm:$0xff]
    %v192 = vld [vmem:[%s189 + $0x10] sm:$0xff]
    %v193 = vld [vmem:[%s189 + $0x18] sm:$0xff]
    %s194 = scalar_lea.vmem [#allocation7], 1
    %v195 = vld [vmem:[%s194] sm:$0x1]
    %v197 = vlaneseq
    %v198 = vshrl.u32 %v197, 7
    %v199 = vsub.s32 0, %v198
    %v200 = vrot.slane %v195, %v199
    %202 = vmatprep.subr.mxu0 0.0
    %203 = vmatpush1.msra.mxu0 0.0
    %204 = vmatprep.subr.mxu0 0.0
    %205 = vmatpush1.msra.mxu0 0.0
    %206 = vmatprep.subr.mxu0 0.0
    %207 = vmatpush1.msra.mxu0 0.0
    %208 = vmatprep.subr.mxu0 0.0
    %209 = vmatpush1.msra.mxu0 0.0
    %210 = vmatprep.subr.mxu0 0.0
    %211 = vmatpush1.msra.mxu0 0.0
    %212 = vmatprep.subr.mxu0 0.0
    %213 = vmatpush1.msra.mxu0 0.0
    %214 = vmatprep.subr.mxu0 0.0
    %215 = vmatpush1.msra.mxu0 0.0
    %216 = vmatprep.subr.mxu0 0.0
    %217 = vmatpush1.msra.mxu0 0.0
    %218 = vmatprep.subr.mxu0 0.0
    %219 = vmatpush1.msra.mxu0 0.0
    %220 = vmatprep.subr.mxu0 0.0
    %221 = vmatpush1.msra.mxu0 0.0
    %222 = vmatprep.subr.mxu0 0.0
    %223 = vmatpush1.msra.mxu0 0.0
    %224 = vmatprep.subr.mxu0 0.0
    %225 = vmatpush1.msra.mxu0 0.0
    %226 = vmatprep.subr.mxu0 0.0
    %227 = vmatpush1.msra.mxu0 %v193
    %228 = vmatprep.subr.mxu0 0.0
    %229 = vmatpush1.msra.mxu0 %v192
    %230 = vmatprep.subr.mxu0 0.0
    %231 = vmatpush1.msra.mxu0 %v191
    %232 = vmatprep.subr.mxu0 0.0
    %233 = vmatpush1.msra.mxu0 %v190
    %234 = vmatprep.subr.mxu0 0.0
    %235 = vmatpush2.msra.mxu0 0.0
    %236 = vmatprep.subr.mxu0 0.0
    %237 = vmatpush2.msra.mxu0 0.0
    %238 = vmatprep.subr.mxu0 0.0
    %239 = vmatpush2.msra.mxu0 0.0
    %240 = vmatprep.subr.mxu0 0.0
    %241 = vmatpush2.msra.mxu0 0.0
    %242 = vmatprep.subr.mxu0 0.0
    %243 = vmatpush2.msra.mxu0 0.0
    %244 = vmatprep.subr.mxu0 0.0
    %245 = vmatpush2.msra.mxu0 0.0
    %246 = vmatprep.subr.mxu0 0.0
    %247 = vmatpush2.msra.mxu0 0.0
    %248 = vmatprep.subr.mxu0 0.0
    %249 = vmatpush2.msra.mxu0 0.0
    %250 = vmatprep.subr.mxu0 0.0
    %251 = vmatpush2.msra.mxu0 0.0
    %252 = vmatprep.subr.mxu0 0.0
    %253 = vmatpush2.msra.mxu0 0.0
    %254 = vmatprep.subr.mxu0 0.0
    %255 = vmatpush2.msra.mxu0 0.0
    %256 = vmatprep.subr.mxu0 0.0
    %257 = vmatpush2.msra.mxu0 0.0
    %258 = vmatprep.subr.mxu0 0.0
    %259 = vmatpush2.msra.mxu0 0.0
    %260 = vmatprep.subr.mxu0 0.0
    %261 = vmatpush2.msra.mxu0 0.0
    %262 = vmatprep.subr.mxu0 0.0
    %263 = vmatpush2.msra.mxu0 0.0
    %264 = vmatprep.subr.mxu0 0.0
    %265 = vmatpush2.msra.mxu0 0.0
    %266 = vmatprep.mubr.f32.mxu0 0.0
    %267 = vmatmul.mubr.f32.gmra.mxu0 %v109
    %v268 = vpop.f32.mrf.mxu0
    %v269 = vadd.f32 %v200, %v268
    %v270 = vpop.f32.mrf.mxu0
    %271 = vmatprep.mubr.f32.mxu0 0.0
    %272 = vmatmul.mubr.f32.gmra.mxu0 %v112
    %v273 = vpop.f32.mrf.mxu0
    %v274 = vadd.f32 %v200, %v273
    %v275 = vpop.f32.mrf.mxu0
    %276 = vdwg.mxu0
    %s277 = scalar_lea.vmem [#allocation5], 64
    %v278 = vld [vmem:[%s277] sm:$0xff]
    %v279 = vld [vmem:[%s277 + $0x8] sm:$0xff]
    %v280 = vld [vmem:[%s277 + $0x10] sm:$0xff]
    %v281 = vld [vmem:[%s277 + $0x18] sm:$0xff]
    %s282 = scalar_lea.vmem [#allocation7], 2
    %v283 = vld [vmem:[%s282] sm:$0x1]
    %v285 = vlaneseq
    %v286 = vshrl.u32 %v285, 7
    %v287 = vsub.s32 0, %v286
    %v288 = vrot.slane %v283, %v287
    %290 = vmatprep.subr.mxu0 0.0
    %291 = vmatpush1.msra.mxu0 0.0
    %292 = vmatprep.subr.mxu0 0.0
    %293 = vmatpush1.msra.mxu0 0.0
    %294 = vmatprep.subr.mxu0 0.0
    %295 = vmatpush1.msra.mxu0 0.0
    %296 = vmatprep.subr.mxu0 0.0
    %297 = vmatpush1.msra.mxu0 0.0
    %298 = vmatprep.subr.mxu0 0.0
    %299 = vmatpush1.msra.mxu0 0.0
    %300 = vmatprep.subr.mxu0 0.0
    %301 = vmatpush1.msra.mxu0 0.0
    %302 = vmatprep.subr.mxu0 0.0
    %303 = vmatpush1.msra.mxu0 0.0
    %304 = vmatprep.subr.mxu0 0.0
    %305 = vmatpush1.msra.mxu0 0.0
    %306 = vmatprep.subr.mxu0 0.0
    %307 = vmatpush1.msra.mxu0 0.0
    %308 = vmatprep.subr.mxu0 0.0
    %309 = vmatpush1.msra.mxu0 0.0
    %310 = vmatprep.subr.mxu0 0.0
    %311 = vmatpush1.msra.mxu0 0.0
    %312 = vmatprep.subr.mxu0 0.0
    %313 = vmatpush1.msra.mxu0 0.0
    %314 = vmatprep.subr.mxu0 0.0
    %315 = vmatpush1.msra.mxu0 %v281
    %316 = vmatprep.subr.mxu0 0.0
    %317 = vmatpush1.msra.mxu0 %v280
    %318 = vmatprep.subr.mxu0 0.0
    %319 = vmatpush1.msra.mxu0 %v279
    %320 = vmatprep.subr.mxu0 0.0
    %321 = vmatpush1.msra.mxu0 %v278
    %322 = vmatprep.subr.mxu0 0.0
    %323 = vmatpush2.msra.mxu0 0.0
    %324 = vmatprep.subr.mxu0 0.0
    %325 = vmatpush2.msra.mxu0 0.0
    %326 = vmatprep.subr.mxu0 0.0
    %327 = vmatpush2.msra.mxu0 0.0
    %328 = vmatprep.subr.mxu0 0.0
    %329 = vmatpush2.msra.mxu0 0.0
    %330 = vmatprep.subr.mxu0 0.0
    %331 = vmatpush2.msra.mxu0 0.0
    %332 = vmatprep.subr.mxu0 0.0
    %333 = vmatpush2.msra.mxu0 0.0
    %334 = vmatprep.subr.mxu0 0.0
    %335 = vmatpush2.msra.mxu0 0.0
    %336 = vmatprep.subr.mxu0 0.0
    %337 = vmatpush2.msra.mxu0 0.0
    %338 = vmatprep.subr.mxu0 0.0
    %339 = vmatpush2.msra.mxu0 0.0
    %340 = vmatprep.subr.mxu0 0.0
    %341 = vmatpush2.msra.mxu0 0.0
    %342 = vmatprep.subr.mxu0 0.0
    %343 = vmatpush2.msra.mxu0 0.0
    %344 = vmatprep.subr.mxu0 0.0
    %345 = vmatpush2.msra.mxu0 0.0
    %346 = vmatprep.subr.mxu0 0.0
    %347 = vmatpush2.msra.mxu0 0.0
    %348 = vmatprep.subr.mxu0 0.0
    %349 = vmatpush2.msra.mxu0 0.0
    %350 = vmatprep.subr.mxu0 0.0
    %351 = vmatpush2.msra.mxu0 0.0
    %352 = vmatprep.subr.mxu0 0.0
    %353 = vmatpush2.msra.mxu0 0.0
    %354 = vmatprep.mubr.f32.mxu0 0.0
    %355 = vmatmul.mubr.f32.gmra.mxu0 %v109
    %v356 = vpop.f32.mrf.mxu0
    %v357 = vadd.f32 %v288, %v356
    %v358 = vpop.f32.mrf.mxu0
    %359 = vmatprep.mubr.f32.mxu0 0.0
    %360 = vmatmul.mubr.f32.gmra.mxu0 %v112
    %v361 = vpop.f32.mrf.mxu0
    %v362 = vadd.f32 %v288, %v361
    %v363 = vpop.f32.mrf.mxu0
    %364 = vdwg.mxu0
    %s365 = scalar_lea.vmem [#allocation5], 96
    %v366 = vld [vmem:[%s365] sm:$0xff]
    %v367 = vld [vmem:[%s365 + $0x8] sm:$0xff]
    %v368 = vld [vmem:[%s365 + $0x10] sm:$0xff]
    %v369 = vld [vmem:[%s365 + $0x18] sm:$0xff]
    %s370 = scalar_lea.vmem [#allocation7], 3
    %v371 = vld [vmem:[%s370] sm:$0x1]
    %v373 = vlaneseq
    %v374 = vshrl.u32 %v373, 7
    %v375 = vsub.s32 0, %v374
    %v376 = vrot.slane %v371, %v375
    %378 = vmatprep.subr.mxu0 0.0
    %379 = vmatpush1.msra.mxu0 0.0
    %380 = vmatprep.subr.mxu0 0.0
    %381 = vmatpush1.msra.mxu0 0.0
    %382 = vmatprep.subr.mxu0 0.0
    %383 = vmatpush1.msra.mxu0 0.0
    %384 = vmatprep.subr.mxu0 0.0
    %385 = vmatpush1.msra.mxu0 0.0
    %386 = vmatprep.subr.mxu0 0.0
    %387 = vmatpush1.msra.mxu0 0.0
    %388 = vmatprep.subr.mxu0 0.0
    %389 = vmatpush1.msra.mxu0 0.0
    %390 = vmatprep.subr.mxu0 0.0
    %391 = vmatpush1.msra.mxu0 0.0
    %392 = vmatprep.subr.mxu0 0.0
    %393 = vmatpush1.msra.mxu0 0.0
    %394 = vmatprep.subr.mxu0 0.0
    %395 = vmatpush1.msra.mxu0 0.0
    %396 = vmatprep.subr.mxu0 0.0
    %397 = vmatpush1.msra.mxu0 0.0
    %398 = vmatprep.subr.mxu0 0.0
    %399 = vmatpush1.msra.mxu0 0.0
    %400 = vmatprep.subr.mxu0 0.0
    %401 = vmatpush1.msra.mxu0 0.0
    %402 = vmatprep.subr.mxu0 0.0
    %403 = vmatpush1.msra.mxu0 %v369
    %404 = vmatprep.subr.mxu0 0.0
    %405 = vmatpush1.msra.mxu0 %v368
    %406 = vmatprep.subr.mxu0 0.0
    %407 = vmatpush1.msra.mxu0 %v367
    %408 = vmatprep.subr.mxu0 0.0
    %409 = vmatpush1.msra.mxu0 %v366
    %410 = vmatprep.subr.mxu0 0.0
    %411 = vmatpush2.msra.mxu0 0.0
    %412 = vmatprep.subr.mxu0 0.0
    %413 = vmatpush2.msra.mxu0 0.0
    %414 = vmatprep.subr.mxu0 0.0
    %415 = vmatpush2.msra.mxu0 0.0
    %416 = vmatprep.subr.mxu0 0.0
    %417 = vmatpush2.msra.mxu0 0.0
    %418 = vmatprep.subr.mxu0 0.0
    %419 = vmatpush2.msra.mxu0 0.0
    %420 = vmatprep.subr.mxu0 0.0
    %421 = vmatpush2.msra.mxu0 0.0
    %422 = vmatprep.subr.mxu0 0.0
    %423 = vmatpush2.msra.mxu0 0.0
    %424 = vmatprep.subr.mxu0 0.0
    %425 = vmatpush2.msra.mxu0 0.0
    %426 = vmatprep.subr.mxu0 0.0
    %427 = vmatpush2.msra.mxu0 0.0
    %428 = vmatprep.subr.mxu0 0.0
    %429 = vmatpush2.msra.mxu0 0.0
    %430 = vmatprep.subr.mxu0 0.0
    %431 = vmatpush2.msra.mxu0 0.0
    %432 = vmatprep.subr.mxu0 0.0
    %433 = vmatpush2.msra.mxu0 0.0
    %434 = vmatprep.subr.mxu0 0.0
    %435 = vmatpush2.msra.mxu0 0.0
    %436 = vmatprep.subr.mxu0 0.0
    %437 = vmatpush2.msra.mxu0 0.0
    %438 = vmatprep.subr.mxu0 0.0
    %439 = vmatpush2.msra.mxu0 0.0
    %440 = vmatprep.subr.mxu0 0.0
    %441 = vmatpush2.msra.mxu0 0.0
    %442 = vmatprep.mubr.f32.mxu0 0.0
    %443 = vmatmul.mubr.f32.gmra.mxu0 %v109
    %v444 = vpop.f32.mrf.mxu0
    %v445 = vadd.f32 %v376, %v444
    %v446 = vpop.f32.mrf.mxu0
    %447 = vmatprep.mubr.f32.mxu0 0.0
    %448 = vmatmul.mubr.f32.gmra.mxu0 %v112
    %v449 = vpop.f32.mrf.mxu0
    %v450 = vadd.f32 %v376, %v449
    %v451 = vpop.f32.mrf.mxu0
    %452 = vdwg.mxu0
    %vm453 = vcmask 130048
    %v455 = vsel %vm453, %v88, 0
    %v458 = vsel %vm453, %v89, 0
    %460 = vmatprep.subr.mxu0 0.0
    %461 = vmatpush1.msra.mxu0 0.0
    %462 = vmatprep.subr.mxu0 0.0
    %463 = vmatpush1.msra.mxu0 0.0
    %464 = vmatprep.subr.mxu0 0.0
    %465 = vmatpush1.msra.mxu0 0.0
    %466 = vmatprep.subr.mxu0 0.0
    %467 = vmatpush1.msra.mxu0 0.0
    %468 = vmatprep.subr.mxu0 0.0
    %469 = vmatpush1.msra.mxu0 0.0
    %470 = vmatprep.subr.mxu0 0.0
    %471 = vmatpush1.msra.mxu0 0.0
    %472 = vmatprep.subr.mxu0 0.0
    %473 = vmatpush1.msra.mxu0 0.0
    %474 = vmatprep.subr.mxu0 0.0
    %475 = vmatpush1.msra.mxu0 0.0
    %476 = vmatprep.subr.mxu0 0.0
    %477 = vmatpush1.msra.mxu0 0.0
    %478 = vmatprep.subr.mxu0 0.0
    %479 = vmatpush1.msra.mxu0 0.0
    %480 = vmatprep.subr.mxu0 0.0
    %481 = vmatpush1.msra.mxu0 0.0
    %482 = vmatprep.subr.mxu0 0.0
    %483 = vmatpush1.msra.mxu0 0.0
    %484 = vmatprep.subr.mxu0 0.0
    %485 = vmatpush1.msra.mxu0 0.0
    %486 = vmatprep.subr.mxu0 0.0
    %487 = vmatpush1.msra.mxu0 0.0
    %488 = vmatprep.subr.mxu0 0.0
    %489 = vmatpush1.msra.mxu0 %v186
    %490 = vmatprep.subr.mxu0 0.0
    %491 = vmatpush1.msra.mxu0 %v181
    %492 = vmatprep.subr.mxu0 0.0
    %493 = vmatpush2.msra.mxu0 0.0
    %494 = vmatprep.subr.mxu0 0.0
    %495 = vmatpush2.msra.mxu0 0.0
    %496 = vmatprep.subr.mxu0 0.0
    %497 = vmatpush2.msra.mxu0 0.0
    %498 = vmatprep.subr.mxu0 0.0
    %499 = vmatpush2.msra.mxu0 0.0
    %500 = vmatprep.subr.mxu0 0.0
    %501 = vmatpush2.msra.mxu0 0.0
    %502 = vmatprep.subr.mxu0 0.0
    %503 = vmatpush2.msra.mxu0 0.0
    %504 = vmatprep.subr.mxu0 0.0
    %505 = vmatpush2.msra.mxu0 0.0
    %506 = vmatprep.subr.mxu0 0.0
    %507 = vmatpush2.msra.mxu0 0.0
    %508 = vmatprep.subr.mxu0 0.0
    %509 = vmatpush2.msra.mxu0 0.0
    %510 = vmatprep.subr.mxu0 0.0
    %511 = vmatpush2.msra.mxu0 0.0
    %512 = vmatprep.subr.mxu0 0.0
    %513 = vmatpush2.msra.mxu0 0.0
    %514 = vmatprep.subr.mxu0 0.0
    %515 = vmatpush2.msra.mxu0 0.0
    %516 = vmatprep.subr.mxu0 0.0
    %517 = vmatpush2.msra.mxu0 0.0
    %518 = vmatprep.subr.mxu0 0.0
    %519 = vmatpush2.msra.mxu0 0.0
    %520 = vmatprep.subr.mxu0 0.0
    %521 = vmatpush2.msra.mxu0 0.0
    %522 = vmatprep.subr.mxu0 0.0
    %523 = vmatpush2.msra.mxu0 0.0
    %524 = vmatprep.mubr.f32.mxu0 0.0
    %525 = vmatmul.mubr.f32.gmra.mxu0 %v455
    %v526 = vpop.f32.mrf.mxu0
    %v527 = vadd.f32 0.0, %v526
    %v528 = vpop.f32.mrf.mxu0
    %529 = vmatprep.mubr.f32.mxu0 0.0
    %530 = vmatmul.mubr.f32.gmra.mxu0 %v458
    %v531 = vpop.f32.mrf.mxu0
    %v532 = vadd.f32 0.0, %v531
    %v533 = vpop.f32.mrf.mxu0
    %534 = vdwg.mxu0
    %v536 = vsel %vm453, %v91, 0
    %v539 = vsel %vm453, %v92, 0
    %541 = vmatprep.subr.mxu0 0.0
    %542 = vmatpush1.msra.mxu0 0.0
    %543 = vmatprep.subr.mxu0 0.0
    %544 = vmatpush1.msra.mxu0 0.0
    %545 = vmatprep.subr.mxu0 0.0
    %546 = vmatpush1.msra.mxu0 0.0
    %547 = vmatprep.subr.mxu0 0.0
    %548 = vmatpush1.msra.mxu0 0.0
    %549 = vmatprep.subr.mxu0 0.0
    %550 = vmatpush1.msra.mxu0 0.0
    %551 = vmatprep.subr.mxu0 0.0
    %552 = vmatpush1.msra.mxu0 0.0
    %553 = vmatprep.subr.mxu0 0.0
    %554 = vmatpush1.msra.mxu0 0.0
    %555 = vmatprep.subr.mxu0 0.0
    %556 = vmatpush1.msra.mxu0 0.0
    %557 = vmatprep.subr.mxu0 0.0
    %558 = vmatpush1.msra.mxu0 0.0
    %559 = vmatprep.subr.mxu0 0.0
    %560 = vmatpush1.msra.mxu0 0.0
    %561 = vmatprep.subr.mxu0 0.0
    %562 = vmatpush1.msra.mxu0 0.0
    %563 = vmatprep.subr.mxu0 0.0
    %564 = vmatpush1.msra.mxu0 0.0
    %565 = vmatprep.subr.mxu0 0.0
    %566 = vmatpush1.msra.mxu0 0.0
    %567 = vmatprep.subr.mxu0 0.0
    %568 = vmatpush1.msra.mxu0 0.0
    %569 = vmatprep.subr.mxu0 0.0
    %570 = vmatpush1.msra.mxu0 %v274
    %571 = vmatprep.subr.mxu0 0.0
    %572 = vmatpush1.msra.mxu0 %v269
    %573 = vmatprep.subr.mxu0 0.0
    %574 = vmatpush2.msra.mxu0 0.0
    %575 = vmatprep.subr.mxu0 0.0
    %576 = vmatpush2.msra.mxu0 0.0
    %577 = vmatprep.subr.mxu0 0.0
    %578 = vmatpush2.msra.mxu0 0.0
    %579 = vmatprep.subr.mxu0 0.0
    %580 = vmatpush2.msra.mxu0 0.0
    %581 = vmatprep.subr.mxu0 0.0
    %582 = vmatpush2.msra.mxu0 0.0
    %583 = vmatprep.subr.mxu0 0.0
    %584 = vmatpush2.msra.mxu0 0.0
    %585 = vmatprep.subr.mxu0 0.0
    %586 = vmatpush2.msra.mxu0 0.0
    %587 = vmatprep.subr.mxu0 0.0
    %588 = vmatpush2.msra.mxu0 0.0
    %589 = vmatprep.subr.mxu0 0.0
    %590 = vmatpush2.msra.mxu0 0.0
    %591 = vmatprep.subr.mxu0 0.0
    %592 = vmatpush2.msra.mxu0 0.0
    %593 = vmatprep.subr.mxu0 0.0
    %594 = vmatpush2.msra.mxu0 0.0
    %595 = vmatprep.subr.mxu0 0.0
    %596 = vmatpush2.msra.mxu0 0.0
    %597 = vmatprep.subr.mxu0 0.0
    %598 = vmatpush2.msra.mxu0 0.0
    %599 = vmatprep.subr.mxu0 0.0
    %600 = vmatpush2.msra.mxu0 0.0
    %601 = vmatprep.subr.mxu0 0.0
    %602 = vmatpush2.msra.mxu0 0.0
    %603 = vmatprep.subr.mxu0 0.0
    %604 = vmatpush2.msra.mxu0 0.0
    %605 = vmatprep.mubr.f32.mxu0 0.0
    %606 = vmatmul.mubr.f32.gmra.mxu0 %v536
    %v607 = vpop.f32.mrf.mxu0
    %v608 = vadd.f32 0.0, %v607
    %v609 = vpop.f32.mrf.mxu0
    %610 = vmatprep.mubr.f32.mxu0 0.0
    %611 = vmatmul.mubr.f32.gmra.mxu0 %v539
    %v612 = vpop.f32.mrf.mxu0
    %v613 = vadd.f32 0.0, %v612
    %v614 = vpop.f32.mrf.mxu0
    %615 = vdwg.mxu0
    %v617 = vsel %vm453, %v94, 0
    %v620 = vsel %vm453, %v95, 0
    %622 = vmatprep.subr.mxu0 0.0
    %623 = vmatpush1.msra.mxu0 0.0
    %624 = vmatprep.subr.mxu0 0.0
    %625 = vmatpush1.msra.mxu0 0.0
    %626 = vmatprep.subr.mxu0 0.0
    %627 = vmatpush1.msra.mxu0 0.0
    %628 = vmatprep.subr.mxu0 0.0
    %629 = vmatpush1.msra.mxu0 0.0
    %630 = vmatprep.subr.mxu0 0.0
    %631 = vmatpush1.msra.mxu0 0.0
    %632 = vmatprep.subr.mxu0 0.0
    %633 = vmatpush1.msra.mxu0 0.0
    %634 = vmatprep.subr.mxu0 0.0
    %635 = vmatpush1.msra.mxu0 0.0
    %636 = vmatprep.subr.mxu0 0.0
    %637 = vmatpush1.msra.mxu0 0.0
    %638 = vmatprep.subr.mxu0 0.0
    %639 = vmatpush1.msra.mxu0 0.0
    %640 = vmatprep.subr.mxu0 0.0
    %641 = vmatpush1.msra.mxu0 0.0
    %642 = vmatprep.subr.mxu0 0.0
    %643 = vmatpush1.msra.mxu0 0.0
    %644 = vmatprep.subr.mxu0 0.0
    %645 = vmatpush1.msra.mxu0 0.0
    %646 = vmatprep.subr.mxu0 0.0
    %647 = vmatpush1.msra.mxu0 0.0
    %648 = vmatprep.subr.mxu0 0.0
    %649 = vmatpush1.msra.mxu0 0.0
    %650 = vmatprep.subr.mxu0 0.0
    %651 = vmatpush1.msra.mxu0 %v362
    %652 = vmatprep.subr.mxu0 0.0
    %653 = vmatpush1.msra.mxu0 %v357
    %654 = vmatprep.subr.mxu0 0.0
    %655 = vmatpush2.msra.mxu0 0.0
    %656 = vmatprep.subr.mxu0 0.0
    %657 = vmatpush2.msra.mxu0 0.0
    %658 = vmatprep.subr.mxu0 0.0
    %659 = vmatpush2.msra.mxu0 0.0
    %660 = vmatprep.subr.mxu0 0.0
    %661 = vmatpush2.msra.mxu0 0.0
    %662 = vmatprep.subr.mxu0 0.0
    %663 = vmatpush2.msra.mxu0 0.0
    %664 = vmatprep.subr.mxu0 0.0
    %665 = vmatpush2.msra.mxu0 0.0
    %666 = vmatprep.subr.mxu0 0.0
    %667 = vmatpush2.msra.mxu0 0.0
    %668 = vmatprep.subr.mxu0 0.0
    %669 = vmatpush2.msra.mxu0 0.0
    %670 = vmatprep.subr.mxu0 0.0
    %671 = vmatpush2.msra.mxu0 0.0
    %672 = vmatprep.subr.mxu0 0.0
    %673 = vmatpush2.msra.mxu0 0.0
    %674 = vmatprep.subr.mxu0 0.0
    %675 = vmatpush2.msra.mxu0 0.0
    %676 = vmatprep.subr.mxu0 0.0
    %677 = vmatpush2.msra.mxu0 0.0
    %678 = vmatprep.subr.mxu0 0.0
    %679 = vmatpush2.msra.mxu0 0.0
    %680 = vmatprep.subr.mxu0 0.0
    %681 = vmatpush2.msra.mxu0 0.0
    %682 = vmatprep.subr.mxu0 0.0
    %683 = vmatpush2.msra.mxu0 0.0
    %684 = vmatprep.subr.mxu0 0.0
    %685 = vmatpush2.msra.mxu0 0.0
    %686 = vmatprep.mubr.f32.mxu0 0.0
    %687 = vmatmul.mubr.f32.gmra.mxu0 %v617
    %v688 = vpop.f32.mrf.mxu0
    %v689 = vadd.f32 0.0, %v688
    %v690 = vpop.f32.mrf.mxu0
    %691 = vmatprep.mubr.f32.mxu0 0.0
    %692 = vmatmul.mubr.f32.gmra.mxu0 %v620
    %v693 = vpop.f32.mrf.mxu0
    %v694 = vadd.f32 0.0, %v693
    %v695 = vpop.f32.mrf.mxu0
    %696 = vdwg.mxu0
    %v698 = vsel %vm107, %v608, 0
    %v701 = vsel %vm107, %v613, 0
    %v704 = vsel %vm107, %v689, 0
    %v707 = vsel %vm107, %v694, 0
    %v710 = vsel %vm107, %v527, 0
    %v713 = vsel %vm107, %v532, 0
    %715 = vmatprep.subr.mxu0 0.0
    %716 = vmatpush1.xpose.msra.mxu0 0.0
    %717 = vmatprep.subr.mxu0 0.0
    %718 = vmatpush1.xpose.msra.mxu0 0.0
    %719 = vmatprep.subr.mxu0 0.0
    %720 = vmatpush1.xpose.msra.mxu0 0.0
    %721 = vmatprep.subr.mxu0 0.0
    %722 = vmatpush1.xpose.msra.mxu0 0.0
    %723 = vmatprep.subr.mxu0 0.0
    %724 = vmatpush1.xpose.msra.mxu0 0.0
    %725 = vmatprep.subr.mxu0 0.0
    %726 = vmatpush1.xpose.msra.mxu0 0.0
    %727 = vmatprep.subr.mxu0 0.0
    %728 = vmatpush1.xpose.msra.mxu0 0.0
    %729 = vmatprep.subr.mxu0 0.0
    %730 = vmatpush1.xpose.msra.mxu0 0.0
    %731 = vmatprep.subr.mxu0 0.0
    %732 = vmatpush1.xpose.msra.mxu0 0.0
    %733 = vmatprep.subr.mxu0 0.0
    %734 = vmatpush1.xpose.msra.mxu0 0.0
    %735 = vmatprep.subr.mxu0 0.0
    %736 = vmatpush1.xpose.msra.mxu0 0.0
    %737 = vmatprep.subr.mxu0 0.0
    %738 = vmatpush1.xpose.msra.mxu0 0.0
    %739 = vmatprep.subr.mxu0 0.0
    %740 = vmatpush1.xpose.msra.mxu0 0.0
    %741 = vmatprep.subr.mxu0 0.0
    %742 = vmatpush1.xpose.msra.mxu0 0.0
    %743 = vmatprep.subr.mxu0 0.0
    %744 = vmatpush1.xpose.msra.mxu0 %v713
    %745 = vmatprep.subr.mxu0 0.0
    %746 = vmatpush1.xpose.msra.mxu0 %v710
    %747 = vmatprep.subr.mxu0 0.0
    %748 = vmatpush2.xpose.msra.mxu0 0.0
    %749 = vmatprep.subr.mxu0 0.0
    %750 = vmatpush2.xpose.msra.mxu0 0.0
    %751 = vmatprep.subr.mxu0 0.0
    %752 = vmatpush2.xpose.msra.mxu0 0.0
    %753 = vmatprep.subr.mxu0 0.0
    %754 = vmatpush2.xpose.msra.mxu0 0.0
    %755 = vmatprep.subr.mxu0 0.0
    %756 = vmatpush2.xpose.msra.mxu0 0.0
    %757 = vmatprep.subr.mxu0 0.0
    %758 = vmatpush2.xpose.msra.mxu0 0.0
    %759 = vmatprep.subr.mxu0 0.0
    %760 = vmatpush2.xpose.msra.mxu0 0.0
    %761 = vmatprep.subr.mxu0 0.0
    %762 = vmatpush2.xpose.msra.mxu0 0.0
    %763 = vmatprep.subr.mxu0 0.0
    %764 = vmatpush2.xpose.msra.mxu0 0.0
    %765 = vmatprep.subr.mxu0 0.0
    %766 = vmatpush2.xpose.msra.mxu0 0.0
    %767 = vmatprep.subr.mxu0 0.0
    %768 = vmatpush2.xpose.msra.mxu0 0.0
    %769 = vmatprep.subr.mxu0 0.0
    %770 = vmatpush2.xpose.msra.mxu0 0.0
    %771 = vmatprep.subr.mxu0 0.0
    %772 = vmatpush2.xpose.msra.mxu0 0.0
    %773 = vmatprep.subr.mxu0 0.0
    %774 = vmatpush2.xpose.msra.mxu0 0.0
    %775 = vmatprep.subr.mxu0 0.0
    %776 = vmatpush2.xpose.msra.mxu0 0.0
    %777 = vmatprep.subr.mxu0 0.0
    %778 = vmatpush2.xpose.msra.mxu0 0.0
    %779 = vmatprep.mubr.f32.mxu0 0.0
    %780 = vmatmul.mubr.f32.gmra.mxu0 %v698
    %v781 = vpop.f32.mrf.mxu0
    %v782 = vadd.f32 %v84, %v781
    %v783 = vpop.f32.mrf.mxu0
    %784 = vmatprep.mubr.f32.mxu0 0.0
    %785 = vmatmul.mubr.f32.gmra.mxu0 %v701
    %v786 = vpop.f32.mrf.mxu0
    %v787 = vadd.f32 %v85, %v786
    %v788 = vpop.f32.mrf.mxu0
    %789 = vmatprep.mubr.f32.mxu0 0.0
    %790 = vmatmul.mubr.f32.gmra.mxu0 %v704
    %v791 = vpop.f32.mrf.mxu0
    %v792 = vadd.f32 %v86, %v791
    %v793 = vpop.f32.mrf.mxu0
    %794 = vmatprep.mubr.f32.mxu0 0.0
    %795 = vmatmul.mubr.f32.gmra.mxu0 %v707
    %v796 = vpop.f32.mrf.mxu0
    %v797 = vadd.f32 %v87, %v796
    %v798 = vpop.f32.mrf.mxu0
    %799 = vdwg.mxu0
    %v800 = vsel %vm453, %v782, -inf
    %801 = vmax.xlane.f32.xlu0 %v800
    %v802 = vpop.xlane.xlu0 %801
    %v803 = vsel %vm453, %v787, -inf
    %804 = vmax.xlane.f32.xlu0 %v803
    %v805 = vpop.xlane.xlu0 %804
    %v806 = vsel %vm453, %v792, -inf
    %807 = vmax.xlane.f32.xlu0 %v806
    %v808 = vpop.xlane.xlu0 %807
    %v809 = vsel %vm453, %v797, -inf
    %810 = vmax.xlane.f32.xlu0 %v809
    %v811 = vpop.xlane.xlu0 %810
    %v812 = vsub.f32 %v782, %v802
    %v813 = vsub.f32 %v787, %v805
    %v814 = vsub.f32 %v792, %v808
    %v815 = vsub.f32 %v797, %v811
    %v816 = vmul.f32 %v812, 1.442695
    %v817 = vpow.pop %v816
    %v818 = vmul.f32 %v813, 1.442695
    %v819 = vpow.pop %v818
    %v820 = vmul.f32 %v814, 1.442695
    %v821 = vpow.pop %v820
    %v822 = vmul.f32 %v815, 1.442695
    %v823 = vpow.pop %v822
    %v824 = vsel %vm453, %v817, 0.0
    %825 = vadd.xlane.f32.xlu0 %v824
    %v826 = vpop.xlane.xlu0 %825
    %v827 = vsel %vm453, %v819, 0.0
    %828 = vadd.xlane.f32.xlu0 %v827
    %v829 = vpop.xlane.xlu0 %828
    %v830 = vsel %vm453, %v821, 0.0
    %831 = vadd.xlane.f32.xlu0 %v830
    %v832 = vpop.xlane.xlu0 %831
    %v833 = vsel %vm453, %v823, 0.0
    %834 = vadd.xlane.f32.xlu0 %v833
    %v835 = vpop.xlane.xlu0 %834
    %v836 = vrcp.pop %v826
    %v837 = vrcp.pop %v829
    %v838 = vrcp.pop %v832
    %v839 = vrcp.pop %v835
    %v840 = vmul.f32 %v817, %v836
    %v841 = vmul.f32 %v819, %v837
    %v842 = vmul.f32 %v821, %v838
    %v843 = vmul.f32 %v823, %v839
    %v845 = vsel %vm453, %v840, 0
    %v848 = vsel %vm453, %v841, 0
    %v851 = vsel %vm453, %v842, 0
    %v854 = vsel %vm453, %v843, 0
    %856 = vmatprep.subr.mxu0 0.0
    %857 = vmatpush1.msra.mxu0 0.0
    %858 = vmatprep.subr.mxu0 0.0
    %859 = vmatpush1.msra.mxu0 0.0
    %860 = vmatprep.subr.mxu0 0.0
    %861 = vmatpush1.msra.mxu0 0.0
    %862 = vmatprep.subr.mxu0 0.0
    %863 = vmatpush1.msra.mxu0 0.0
    %864 = vmatprep.subr.mxu0 0.0
    %865 = vmatpush1.msra.mxu0 0.0
    %866 = vmatprep.subr.mxu0 0.0
    %867 = vmatpush1.msra.mxu0 0.0
    %868 = vmatprep.subr.mxu0 0.0
    %869 = vmatpush1.msra.mxu0 0.0
    %870 = vmatprep.subr.mxu0 0.0
    %871 = vmatpush1.msra.mxu0 0.0
    %872 = vmatprep.subr.mxu0 0.0
    %873 = vmatpush1.msra.mxu0 0.0
    %874 = vmatprep.subr.mxu0 0.0
    %875 = vmatpush1.msra.mxu0 0.0
    %876 = vmatprep.subr.mxu0 0.0
    %877 = vmatpush1.msra.mxu0 0.0
    %878 = vmatprep.subr.mxu0 0.0
    %879 = vmatpush1.msra.mxu0 0.0
    %880 = vmatprep.subr.mxu0 0.0
    %881 = vmatpush1.msra.mxu0 0.0
    %882 = vmatprep.subr.mxu0 0.0
    %883 = vmatpush1.msra.mxu0 0.0
    %884 = vmatprep.subr.mxu0 0.0
    %885 = vmatpush1.msra.mxu0 %v532
    %886 = vmatprep.subr.mxu0 0.0
    %887 = vmatpush1.msra.mxu0 %v527
    %888 = vmatprep.subr.mxu0 0.0
    %889 = vmatpush2.msra.mxu0 0.0
    %890 = vmatprep.subr.mxu0 0.0
    %891 = vmatpush2.msra.mxu0 0.0
    %892 = vmatprep.subr.mxu0 0.0
    %893 = vmatpush2.msra.mxu0 0.0
    %894 = vmatprep.subr.mxu0 0.0
    %895 = vmatpush2.msra.mxu0 0.0
    %896 = vmatprep.subr.mxu0 0.0
    %897 = vmatpush2.msra.mxu0 0.0
    %898 = vmatprep.subr.mxu0 0.0
    %899 = vmatpush2.msra.mxu0 0.0
    %900 = vmatprep.subr.mxu0 0.0
    %901 = vmatpush2.msra.mxu0 0.0
    %902 = vmatprep.subr.mxu0 0.0
    %903 = vmatpush2.msra.mxu0 0.0
    %904 = vmatprep.subr.mxu0 0.0
    %905 = vmatpush2.msra.mxu0 0.0
    %906 = vmatprep.subr.mxu0 0.0
    %907 = vmatpush2.msra.mxu0 0.0
    %908 = vmatprep.subr.mxu0 0.0
    %909 = vmatpush2.msra.mxu0 0.0
    %910 = vmatprep.subr.mxu0 0.0
    %911 = vmatpush2.msra.mxu0 0.0
    %912 = vmatprep.subr.mxu0 0.0
    %913 = vmatpush2.msra.mxu0 0.0
    %914 = vmatprep.subr.mxu0 0.0
    %915 = vmatpush2.msra.mxu0 0.0
    %916 = vmatprep.subr.mxu0 0.0
    %917 = vmatpush2.msra.mxu0 0.0
    %918 = vmatprep.subr.mxu0 0.0
    %919 = vmatpush2.msra.mxu0 0.0
    %920 = vmatprep.mubr.f32.mxu0 0.0
    %921 = vmatmul.mubr.f32.gmra.mxu0 %v845
    %v922 = vpop.f32.mrf.mxu0
    %v923 = vadd.f32 0.0, %v922
    %v924 = vpop.f32.mrf.mxu0
    %925 = vmatprep.mubr.f32.mxu0 0.0
    %926 = vmatmul.mubr.f32.gmra.mxu0 %v848
    %v927 = vpop.f32.mrf.mxu0
    %v928 = vadd.f32 0.0, %v927
    %v929 = vpop.f32.mrf.mxu0
    %930 = vmatprep.mubr.f32.mxu0 0.0
    %931 = vmatmul.mubr.f32.gmra.mxu0 %v851
    %v932 = vpop.f32.mrf.mxu0
    %v933 = vadd.f32 0.0, %v932
    %v934 = vpop.f32.mrf.mxu0
    %935 = vmatprep.mubr.f32.mxu0 0.0
    %936 = vmatmul.mubr.f32.gmra.mxu0 %v854
    %v937 = vpop.f32.mrf.mxu0
    %v938 = vadd.f32 0.0, %v937
    %v939 = vpop.f32.mrf.mxu0
    %940 = vdwg.mxu0
    %v941 = vld [vmem:[#allocation8] sm:$0xff]
    %v942 = vld [vmem:[#allocation8 + $0x8] sm:$0xff]
    %v943 = vld [vmem:[#allocation8 + $0x10] sm:$0xff]
    %v944 = vld [vmem:[#allocation8 + $0x18] sm:$0xff]
    %s945 = scalar_lea.vmem [#allocation8], 32
    %v946 = vld [vmem:[%s945] sm:$0xff]
    %v947 = vld [vmem:[%s945 + $0x8] sm:$0xff]
    %v948 = vld [vmem:[%s945 + $0x10] sm:$0xff]
    %v949 = vld [vmem:[%s945 + $0x18] sm:$0xff]
    %v951 = vsel %vm107, %v933, 0
    %v954 = vsel %vm107, %v938, 0
    %956 = vmatprep.subr.mxu0 0.0
    %957 = vmatpush1.msra.mxu0 0.0
    %958 = vmatprep.subr.mxu0 0.0
    %959 = vmatpush1.msra.mxu0 0.0
    %960 = vmatprep.subr.mxu0 0.0
    %961 = vmatpush1.msra.mxu0 0.0
    %962 = vmatprep.subr.mxu0 0.0
    %963 = vmatpush1.msra.mxu0 0.0
    %964 = vmatprep.subr.mxu0 0.0
    %965 = vmatpush1.msra.mxu0 0.0
    %966 = vmatprep.subr.mxu0 0.0
    %967 = vmatpush1.msra.mxu0 0.0
    %968 = vmatprep.subr.mxu0 0.0
    %969 = vmatpush1.msra.mxu0 0.0
    %970 = vmatprep.subr.mxu0 0.0
    %971 = vmatpush1.msra.mxu0 0.0
    %972 = vmatprep.subr.mxu0 0.0
    %973 = vmatpush1.msra.mxu0 0.0
    %974 = vmatprep.subr.mxu0 0.0
    %975 = vmatpush1.msra.mxu0 0.0
    %976 = vmatprep.subr.mxu0 0.0
    %977 = vmatpush1.msra.mxu0 0.0
    %978 = vmatprep.subr.mxu0 0.0
    %979 = vmatpush1.msra.mxu0 0.0
    %980 = vmatprep.subr.mxu0 0.0
    %981 = vmatpush1.msra.mxu0 %v949
    %982 = vmatprep.subr.mxu0 0.0
    %983 = vmatpush1.msra.mxu0 %v948
    %984 = vmatprep.subr.mxu0 0.0
    %985 = vmatpush1.msra.mxu0 %v947
    %986 = vmatprep.subr.mxu0 0.0
    %987 = vmatpush1.msra.mxu0 %v946
    %988 = vmatprep.subr.mxu0 0.0
    %989 = vmatpush2.msra.mxu0 0.0
    %990 = vmatprep.subr.mxu0 0.0
    %991 = vmatpush2.msra.mxu0 0.0
    %992 = vmatprep.subr.mxu0 0.0
    %993 = vmatpush2.msra.mxu0 0.0
    %994 = vmatprep.subr.mxu0 0.0
    %995 = vmatpush2.msra.mxu0 0.0
    %996 = vmatprep.subr.mxu0 0.0
    %997 = vmatpush2.msra.mxu0 0.0
    %998 = vmatprep.subr.mxu0 0.0
    %999 = vmatpush2.msra.mxu0 0.0
    %1000 = vmatprep.subr.mxu0 0.0
    %1001 = vmatpush2.msra.mxu0 0.0
    %1002 = vmatprep.subr.mxu0 0.0
    %1003 = vmatpush2.msra.mxu0 0.0
    %1004 = vmatprep.subr.mxu0 0.0
    %1005 = vmatpush2.msra.mxu0 0.0
    %1006 = vmatprep.subr.mxu0 0.0
    %1007 = vmatpush2.msra.mxu0 0.0
    %1008 = vmatprep.subr.mxu0 0.0
    %1009 = vmatpush2.msra.mxu0 0.0
    %1010 = vmatprep.subr.mxu0 0.0
    %1011 = vmatpush2.msra.mxu0 0.0
    %1012 = vmatprep.subr.mxu0 0.0
    %1013 = vmatpush2.msra.mxu0 0.0
    %1014 = vmatprep.subr.mxu0 0.0
    %1015 = vmatpush2.msra.mxu0 0.0
    %1016 = vmatprep.subr.mxu0 0.0
    %1017 = vmatpush2.msra.mxu0 0.0
    %1018 = vmatprep.subr.mxu0 0.0
    %1019 = vmatpush2.msra.mxu0 0.0
    %1020 = vmatprep.mubr.f32.mxu0 0.0
    %1021 = vmatmul.mubr.f32.gmra.mxu0 %v951
    %v1022 = vpop.f32.mrf.mxu0
    %v1023 = vadd.f32 0.0, %v1022
    %v1024 = vpop.f32.mrf.mxu0
    %1025 = vmatprep.mubr.f32.mxu0 0.0
    %1026 = vmatmul.mubr.f32.gmra.mxu0 %v954
    %v1027 = vpop.f32.mrf.mxu0
    %v1028 = vadd.f32 0.0, %v1027
    %v1029 = vpop.f32.mrf.mxu0
    %1030 = vdwg.mxu0
    %v1032 = vsel %vm107, %v923, 0
    %v1035 = vsel %vm107, %v928, 0
    %1037 = vmatprep.subr.mxu0 0.0
    %1038 = vmatpush1.msra.mxu0 0.0
    %1039 = vmatprep.subr.mxu0 0.0
    %1040 = vmatpush1.msra.mxu0 0.0
    %1041 = vmatprep.subr.mxu0 0.0
    %1042 = vmatpush1.msra.mxu0 0.0
    %1043 = vmatprep.subr.mxu0 0.0
    %1044 = vmatpush1.msra.mxu0 0.0
    %1045 = vmatprep.subr.mxu0 0.0
    %1046 = vmatpush1.msra.mxu0 0.0
    %1047 = vmatprep.subr.mxu0 0.0
    %1048 = vmatpush1.msra.mxu0 0.0
    %1049 = vmatprep.subr.mxu0 0.0
    %1050 = vmatpush1.msra.mxu0 0.0
    %1051 = vmatprep.subr.mxu0 0.0
    %1052 = vmatpush1.msra.mxu0 0.0
    %1053 = vmatprep.subr.mxu0 0.0
    %1054 = vmatpush1.msra.mxu0 0.0
    %1055 = vmatprep.subr.mxu0 0.0
    %1056 = vmatpush1.msra.mxu0 0.0
    %1057 = vmatprep.subr.mxu0 0.0
    %1058 = vmatpush1.msra.mxu0 0.0
    %1059 = vmatprep.subr.mxu0 0.0
    %1060 = vmatpush1.msra.mxu0 0.0
    %1061 = vmatprep.subr.mxu0 0.0
    %1062 = vmatpush1.msra.mxu0 %v944
    %1063 = vmatprep.subr.mxu0 0.0
    %1064 = vmatpush1.msra.mxu0 %v943
    %1065 = vmatprep.subr.mxu0 0.0
    %1066 = vmatpush1.msra.mxu0 %v942
    %1067 = vmatprep.subr.mxu0 0.0
    %1068 = vmatpush1.msra.mxu0 %v941
    %1069 = vmatprep.subr.mxu0 0.0
    %1070 = vmatpush2.msra.mxu0 0.0
    %1071 = vmatprep.subr.mxu0 0.0
    %1072 = vmatpush2.msra.mxu0 0.0
    %1073 = vmatprep.subr.mxu0 0.0
    %1074 = vmatpush2.msra.mxu0 0.0
    %1075 = vmatprep.subr.mxu0 0.0
    %1076 = vmatpush2.msra.mxu0 0.0
    %1077 = vmatprep.subr.mxu0 0.0
    %1078 = vmatpush2.msra.mxu0 0.0
    %1079 = vmatprep.subr.mxu0 0.0
    %1080 = vmatpush2.msra.mxu0 0.0
    %1081 = vmatprep.subr.mxu0 0.0
    %1082 = vmatpush2.msra.mxu0 0.0
    %1083 = vmatprep.subr.mxu0 0.0
    %1084 = vmatpush2.msra.mxu0 0.0
    %1085 = vmatprep.subr.mxu0 0.0
    %1086 = vmatpush2.msra.mxu0 0.0
    %1087 = vmatprep.subr.mxu0 0.0
    %1088 = vmatpush2.msra.mxu0 0.0
    %1089 = vmatprep.subr.mxu0 0.0
    %1090 = vmatpush2.msra.mxu0 0.0
    %1091 = vmatprep.subr.mxu0 0.0
    %1092 = vmatpush2.msra.mxu0 0.0
    %1093 = vmatprep.subr.mxu0 0.0
    %1094 = vmatpush2.msra.mxu0 0.0
    %1095 = vmatprep.subr.mxu0 0.0
    %1096 = vmatpush2.msra.mxu0 0.0
    %1097 = vmatprep.subr.mxu0 0.0
    %1098 = vmatpush2.msra.mxu0 0.0
    %1099 = vmatprep.subr.mxu0 0.0
    %1100 = vmatpush2.msra.mxu0 0.0
    %1101 = vmatprep.mubr.f32.mxu0 0.0
    %1102 = vmatmul.mubr.f32.gmra.mxu0 %v1032
    %v1103 = vpop.f32.mrf.mxu0
    %v1104 = vadd.f32 %v1023, %v1103
    %v1105 = vpop.f32.mrf.mxu0
    %1106 = vmatprep.mubr.f32.mxu0 0.0
    %1107 = vmatmul.mubr.f32.gmra.mxu0 %v1035
    %v1108 = vpop.f32.mrf.mxu0
    %v1109 = vadd.f32 %v1028, %v1108
    %v1110 = vpop.f32.mrf.mxu0
    %1111 = vdwg.mxu0
    %v1112 = vld [vmem:[%s6] sm:$0x1]
    %v1114 = vlaneseq
    %v1115 = vshrl.u32 %v1114, 7
    %v1116 = vsub.s32 0, %v1115
    %v1117 = vrot.slane %v1112, %v1116
    %v1119 = vadd.f32 %v1104, %v1117
    %v1120 = vadd.f32 %v1109, %v1117
    %v1121 = vadd.f32 %v608, %v689
    %v1122 = vadd.f32 %v613, %v694
    %v1123 = vadd.f32 %v1121, %v1119
    %v1124 = vadd.f32 %v1122, %v1120
    %v1125 = vmax.f32 %v1123, 0.0
    %v1126 = vmax.f32 %v1124, 0.0
    %v1127 = vxor.u32 %v445, 2147483648
    %v1128 = vxor.u32 %v450, 2147483648
    %v1129 = vmul.f32 %v1127, 1.442695
    %v1130 = vpow.pop %v1129
    %v1131 = vmul.f32 %v1128, 1.442695
    %v1132 = vpow.pop %v1131
    %v1133 = vadd.f32 %v1130, 1.0
    %v1134 = vadd.f32 %v1132, 1.0
    %v1135 = vrcp.pop %v1133
    %v1136 = vmul.f32 1.0, %v1135
    %v1137 = vrcp.pop %v1134
    %v1138 = vmul.f32 1.0, %v1137
    %v1139 = vmul.f32 %v1125, %v1136
    %v1140 = vmul.f32 %v1126, %v1138
    %v1141 = vsub.f32 1.0, %v1136
    %v1142 = vsub.f32 1.0, %v1138
    %v1143 = vmul.f32 %v82, %v1141
    %v1144 = vmul.f32 %v83, %v1142
    %v1145 = vadd.f32 %v1139, %v1143
    %v1146 = vadd.f32 %v1140, %v1144
    %s1147 = scalar_lea.vmem [#allocation5], 128
    %v1148 = vld [vmem:[%s1147] sm:$0xff]
    %v1149 = vld [vmem:[%s1147 + $0x8] sm:$0xff]
    %v1150 = vld [vmem:[%s1147 + $0x10] sm:$0xff]
    %v1151 = vld [vmem:[%s1147 + $0x18] sm:$0xff]
    %s1152 = scalar_lea.vmem [#allocation7], 4
    %v1153 = vld [vmem:[%s1152] sm:$0x1]
    %v1155 = vlaneseq
    %v1156 = vshrl.u32 %v1155, 7
    %v1157 = vsub.s32 0, %v1156
    %v1158 = vrot.slane %v1153, %v1157
    %v1161 = vsel %vm107, %v1145, 0
    %v1164 = vsel %vm107, %v1146, 0
    %1166 = vmatprep.subr.mxu0 0.0
    %1167 = vmatpush1.msra.mxu0 0.0
    %1168 = vmatprep.subr.mxu0 0.0
    %1169 = vmatpush1.msra.mxu0 0.0
    %1170 = vmatprep.subr.mxu0 0.0
    %1171 = vmatpush1.msra.mxu0 0.0
    %1172 = vmatprep.subr.mxu0 0.0
    %1173 = vmatpush1.msra.mxu0 0.0
    %1174 = vmatprep.subr.mxu0 0.0
    %1175 = vmatpush1.msra.mxu0 0.0
    %1176 = vmatprep.subr.mxu0 0.0
    %1177 = vmatpush1.msra.mxu0 0.0
    %1178 = vmatprep.subr.mxu0 0.0
    %1179 = vmatpush1.msra.mxu0 0.0
    %1180 = vmatprep.subr.mxu0 0.0
    %1181 = vmatpush1.msra.mxu0 0.0
    %1182 = vmatprep.subr.mxu0 0.0
    %1183 = vmatpush1.msra.mxu0 0.0
    %1184 = vmatprep.subr.mxu0 0.0
    %1185 = vmatpush1.msra.mxu0 0.0
    %1186 = vmatprep.subr.mxu0 0.0
    %1187 = vmatpush1.msra.mxu0 0.0
    %1188 = vmatprep.subr.mxu0 0.0
    %1189 = vmatpush1.msra.mxu0 0.0
    %1190 = vmatprep.subr.mxu0 0.0
    %1191 = vmatpush1.msra.mxu0 %v1151
    %1192 = vmatprep.subr.mxu0 0.0
    %1193 = vmatpush1.msra.mxu0 %v1150
    %1194 = vmatprep.subr.mxu0 0.0
    %1195 = vmatpush1.msra.mxu0 %v1149
    %1196 = vmatprep.subr.mxu0 0.0
    %1197 = vmatpush1.msra.mxu0 %v1148
    %1198 = vmatprep.subr.mxu0 0.0
    %1199 = vmatpush2.msra.mxu0 0.0
    %1200 = vmatprep.subr.mxu0 0.0
    %1201 = vmatpush2.msra.mxu0 0.0
    %1202 = vmatprep.subr.mxu0 0.0
    %1203 = vmatpush2.msra.mxu0 0.0
    %1204 = vmatprep.subr.mxu0 0.0
    %1205 = vmatpush2.msra.mxu0 0.0
    %1206 = vmatprep.subr.mxu0 0.0
    %1207 = vmatpush2.msra.mxu0 0.0
    %1208 = vmatprep.subr.mxu0 0.0
    %1209 = vmatpush2.msra.mxu0 0.0
    %1210 = vmatprep.subr.mxu0 0.0
    %1211 = vmatpush2.msra.mxu0 0.0
    %1212 = vmatprep.subr.mxu0 0.0
    %1213 = vmatpush2.msra.mxu0 0.0
    %1214 = vmatprep.subr.mxu0 0.0
    %1215 = vmatpush2.msra.mxu0 0.0
    %1216 = vmatprep.subr.mxu0 0.0
    %1217 = vmatpush2.msra.mxu0 0.0
    %1218 = vmatprep.subr.mxu0 0.0
    %1219 = vmatpush2.msra.mxu0 0.0
    %1220 = vmatprep.subr.mxu0 0.0
    %1221 = vmatpush2.msra.mxu0 0.0
    %1222 = vmatprep.subr.mxu0 0.0
    %1223 = vmatpush2.msra.mxu0 0.0
    %1224 = vmatprep.subr.mxu0 0.0
    %1225 = vmatpush2.msra.mxu0 0.0
    %1226 = vmatprep.subr.mxu0 0.0
    %1227 = vmatpush2.msra.mxu0 0.0
    %1228 = vmatprep.subr.mxu0 0.0
    %1229 = vmatpush2.msra.mxu0 0.0
    %1230 = vmatprep.mubr.f32.mxu0 0.0
    %1231 = vmatmul.mubr.f32.gmra.mxu0 %v1161
    %v1232 = vpop.f32.mrf.mxu0
    %v1233 = vadd.f32 %v1158, %v1232
    %v1234 = vpop.f32.mrf.mxu0
    %1235 = vmatprep.mubr.f32.mxu0 0.0
    %1236 = vmatmul.mubr.f32.gmra.mxu0 %v1164
    %v1237 = vpop.f32.mrf.mxu0
    %v1238 = vadd.f32 %v1158, %v1237
    %v1239 = vpop.f32.mrf.mxu0
    %1240 = vdwg.mxu0
    %s1241 = scalar_lea.vmem [#allocation5], 160
    %v1242 = vld [vmem:[%s1241] sm:$0xff]
    %v1243 = vld [vmem:[%s1241 + $0x8] sm:$0xff]
    %v1244 = vld [vmem:[%s1241 + $0x10] sm:$0xff]
    %v1245 = vld [vmem:[%s1241 + $0x18] sm:$0xff]
    %s1246 = scalar_lea.vmem [#allocation7], 5
    %v1247 = vld [vmem:[%s1246] sm:$0x1]
    %v1249 = vlaneseq
    %v1250 = vshrl.u32 %v1249, 7
    %v1251 = vsub.s32 0, %v1250
    %v1252 = vrot.slane %v1247, %v1251
    %1254 = vmatprep.subr.mxu0 0.0
    %1255 = vmatpush1.msra.mxu0 0.0
    %1256 = vmatprep.subr.mxu0 0.0
    %1257 = vmatpush1.msra.mxu0 0.0
    %1258 = vmatprep.subr.mxu0 0.0
    %1259 = vmatpush1.msra.mxu0 0.0
    %1260 = vmatprep.subr.mxu0 0.0
    %1261 = vmatpush1.msra.mxu0 0.0
    %1262 = vmatprep.subr.mxu0 0.0
    %1263 = vmatpush1.msra.mxu0 0.0
    %1264 = vmatprep.subr.mxu0 0.0
    %1265 = vmatpush1.msra.mxu0 0.0
    %1266 = vmatprep.subr.mxu0 0.0
    %1267 = vmatpush1.msra.mxu0 0.0
    %1268 = vmatprep.subr.mxu0 0.0
    %1269 = vmatpush1.msra.mxu0 0.0
    %1270 = vmatprep.subr.mxu0 0.0
    %1271 = vmatpush1.msra.mxu0 0.0
    %1272 = vmatprep.subr.mxu0 0.0
    %1273 = vmatpush1.msra.mxu0 0.0
    %1274 = vmatprep.subr.mxu0 0.0
    %1275 = vmatpush1.msra.mxu0 0.0
    %1276 = vmatprep.subr.mxu0 0.0
    %1277 = vmatpush1.msra.mxu0 0.0
    %1278 = vmatprep.subr.mxu0 0.0
    %1279 = vmatpush1.msra.mxu0 %v1245
    %1280 = vmatprep.subr.mxu0 0.0
    %1281 = vmatpush1.msra.mxu0 %v1244
    %1282 = vmatprep.subr.mxu0 0.0
    %1283 = vmatpush1.msra.mxu0 %v1243
    %1284 = vmatprep.subr.mxu0 0.0
    %1285 = vmatpush1.msra.mxu0 %v1242
    %1286 = vmatprep.subr.mxu0 0.0
    %1287 = vmatpush2.msra.mxu0 0.0
    %1288 = vmatprep.subr.mxu0 0.0
    %1289 = vmatpush2.msra.mxu0 0.0
    %1290 = vmatprep.subr.mxu0 0.0
    %1291 = vmatpush2.msra.mxu0 0.0
    %1292 = vmatprep.subr.mxu0 0.0
    %1293 = vmatpush2.msra.mxu0 0.0
    %1294 = vmatprep.subr.mxu0 0.0
    %1295 = vmatpush2.msra.mxu0 0.0
    %1296 = vmatprep.subr.mxu0 0.0
    %1297 = vmatpush2.msra.mxu0 0.0
    %1298 = vmatprep.subr.mxu0 0.0
    %1299 = vmatpush2.msra.mxu0 0.0
    %1300 = vmatprep.subr.mxu0 0.0
    %1301 = vmatpush2.msra.mxu0 0.0
    %1302 = vmatprep.subr.mxu0 0.0
    %1303 = vmatpush2.msra.mxu0 0.0
    %1304 = vmatprep.subr.mxu0 0.0
    %1305 = vmatpush2.msra.mxu0 0.0
    %1306 = vmatprep.subr.mxu0 0.0
    %1307 = vmatpush2.msra.mxu0 0.0
    %1308 = vmatprep.subr.mxu0 0.0
    %1309 = vmatpush2.msra.mxu0 0.0
    %1310 = vmatprep.subr.mxu0 0.0
    %1311 = vmatpush2.msra.mxu0 0.0
    %1312 = vmatprep.subr.mxu0 0.0
    %1313 = vmatpush2.msra.mxu0 0.0
    %1314 = vmatprep.subr.mxu0 0.0
    %1315 = vmatpush2.msra.mxu0 0.0
    %1316 = vmatprep.subr.mxu0 0.0
    %1317 = vmatpush2.msra.mxu0 0.0
    %1318 = vmatprep.mubr.f32.mxu0 0.0
    %1319 = vmatmul.mubr.f32.gmra.mxu0 %v1161
    %v1320 = vpop.f32.mrf.mxu0
    %v1321 = vadd.f32 %v1252, %v1320
    %v1322 = vpop.f32.mrf.mxu0
    %1323 = vmatprep.mubr.f32.mxu0 0.0
    %1324 = vmatmul.mubr.f32.gmra.mxu0 %v1164
    %v1325 = vpop.f32.mrf.mxu0
    %v1326 = vadd.f32 %v1252, %v1325
    %v1327 = vpop.f32.mrf.mxu0
    %1328 = vdwg.mxu0
    %s1329 = scalar_lea.vmem [#allocation5], 192
    %v1330 = vld [vmem:[%s1329] sm:$0xff]
    %v1331 = vld [vmem:[%s1329 + $0x8] sm:$0xff]
    %v1332 = vld [vmem:[%s1329 + $0x10] sm:$0xff]
    %v1333 = vld [vmem:[%s1329 + $0x18] sm:$0xff]
    %s1334 = scalar_lea.vmem [#allocation7], 6
    %v1335 = vld [vmem:[%s1334] sm:$0x1]
    %v1337 = vlaneseq
    %v1338 = vshrl.u32 %v1337, 7
    %v1339 = vsub.s32 0, %v1338
    %v1340 = vrot.slane %v1335, %v1339
    %1342 = vmatprep.subr.mxu0 0.0
    %1343 = vmatpush1.msra.mxu0 0.0
    %1344 = vmatprep.subr.mxu0 0.0
    %1345 = vmatpush1.msra.mxu0 0.0
    %1346 = vmatprep.subr.mxu0 0.0
    %1347 = vmatpush1.msra.mxu0 0.0
    %1348 = vmatprep.subr.mxu0 0.0
    %1349 = vmatpush1.msra.mxu0 0.0
    %1350 = vmatprep.subr.mxu0 0.0
    %1351 = vmatpush1.msra.mxu0 0.0
    %1352 = vmatprep.subr.mxu0 0.0
    %1353 = vmatpush1.msra.mxu0 0.0
    %1354 = vmatprep.subr.mxu0 0.0
    %1355 = vmatpush1.msra.mxu0 0.0
    %1356 = vmatprep.subr.mxu0 0.0
    %1357 = vmatpush1.msra.mxu0 0.0
    %1358 = vmatprep.subr.mxu0 0.0
    %1359 = vmatpush1.msra.mxu0 0.0
    %1360 = vmatprep.subr.mxu0 0.0
    %1361 = vmatpush1.msra.mxu0 0.0
    %1362 = vmatprep.subr.mxu0 0.0
    %1363 = vmatpush1.msra.mxu0 0.0
    %1364 = vmatprep.subr.mxu0 0.0
    %1365 = vmatpush1.msra.mxu0 0.0
    %1366 = vmatprep.subr.mxu0 0.0
    %1367 = vmatpush1.msra.mxu0 %v1333
    %1368 = vmatprep.subr.mxu0 0.0
    %1369 = vmatpush1.msra.mxu0 %v1332
    %1370 = vmatprep.subr.mxu0 0.0
    %1371 = vmatpush1.msra.mxu0 %v1331
    %1372 = vmatprep.subr.mxu0 0.0
    %1373 = vmatpush1.msra.mxu0 %v1330
    %1374 = vmatprep.subr.mxu0 0.0
    %1375 = vmatpush2.msra.mxu0 0.0
    %1376 = vmatprep.subr.mxu0 0.0
    %1377 = vmatpush2.msra.mxu0 0.0
    %1378 = vmatprep.subr.mxu0 0.0
    %1379 = vmatpush2.msra.mxu0 0.0
    %1380 = vmatprep.subr.mxu0 0.0
    %1381 = vmatpush2.msra.mxu0 0.0
    %1382 = vmatprep.subr.mxu0 0.0
    %1383 = vmatpush2.msra.mxu0 0.0
    %1384 = vmatprep.subr.mxu0 0.0
    %1385 = vmatpush2.msra.mxu0 0.0
    %1386 = vmatprep.subr.mxu0 0.0
    %1387 = vmatpush2.msra.mxu0 0.0
    %1388 = vmatprep.subr.mxu0 0.0
    %1389 = vmatpush2.msra.mxu0 0.0
    %1390 = vmatprep.subr.mxu0 0.0
    %1391 = vmatpush2.msra.mxu0 0.0
    %1392 = vmatprep.subr.mxu0 0.0
    %1393 = vmatpush2.msra.mxu0 0.0
    %1394 = vmatprep.subr.mxu0 0.0
    %1395 = vmatpush2.msra.mxu0 0.0
    %1396 = vmatprep.subr.mxu0 0.0
    %1397 = vmatpush2.msra.mxu0 0.0
    %1398 = vmatprep.subr.mxu0 0.0
    %1399 = vmatpush2.msra.mxu0 0.0
    %1400 = vmatprep.subr.mxu0 0.0
    %1401 = vmatpush2.msra.mxu0 0.0
    %1402 = vmatprep.subr.mxu0 0.0
    %1403 = vmatpush2.msra.mxu0 0.0
    %1404 = vmatprep.subr.mxu0 0.0
    %1405 = vmatpush2.msra.mxu0 0.0
    %1406 = vmatprep.mubr.f32.mxu0 0.0
    %1407 = vmatmul.mubr.f32.gmra.mxu0 %v1161
    %v1408 = vpop.f32.mrf.mxu0
    %v1409 = vadd.f32 %v1340, %v1408
    %v1410 = vpop.f32.mrf.mxu0
    %1411 = vmatprep.mubr.f32.mxu0 0.0
    %1412 = vmatmul.mubr.f32.gmra.mxu0 %v1164
    %v1413 = vpop.f32.mrf.mxu0
    %v1414 = vadd.f32 %v1340, %v1413
    %v1415 = vpop.f32.mrf.mxu0
    %1416 = vdwg.mxu0
    %s1417 = scalar_lea.vmem [#allocation5], 224
    %v1418 = vld [vmem:[%s1417] sm:$0xff]
    %v1419 = vld [vmem:[%s1417 + $0x8] sm:$0xff]
    %v1420 = vld [vmem:[%s1417 + $0x10] sm:$0xff]
    %v1421 = vld [vmem:[%s1417 + $0x18] sm:$0xff]
    %s1422 = scalar_lea.vmem [#allocation7], 7
    %v1423 = vld [vmem:[%s1422] sm:$0x1]
    %v1425 = vlaneseq
    %v1426 = vshrl.u32 %v1425, 7
    %v1427 = vsub.s32 0, %v1426
    %v1428 = vrot.slane %v1423, %v1427
    %1430 = vmatprep.subr.mxu0 0.0
    %1431 = vmatpush1.msra.mxu0 0.0
    %1432 = vmatprep.subr.mxu0 0.0
    %1433 = vmatpush1.msra.mxu0 0.0
    %1434 = vmatprep.subr.mxu0 0.0
    %1435 = vmatpush1.msra.mxu0 0.0
    %1436 = vmatprep.subr.mxu0 0.0
    %1437 = vmatpush1.msra.mxu0 0.0
    %1438 = vmatprep.subr.mxu0 0.0
    %1439 = vmatpush1.msra.mxu0 0.0
    %1440 = vmatprep.subr.mxu0 0.0
    %1441 = vmatpush1.msra.mxu0 0.0
    %1442 = vmatprep.subr.mxu0 0.0
    %1443 = vmatpush1.msra.mxu0 0.0
    %1444 = vmatprep.subr.mxu0 0.0
    %1445 = vmatpush1.msra.mxu0 0.0
    %1446 = vmatprep.subr.mxu0 0.0
    %1447 = vmatpush1.msra.mxu0 0.0
    %1448 = vmatprep.subr.mxu0 0.0
    %1449 = vmatpush1.msra.mxu0 0.0
    %1450 = vmatprep.subr.mxu0 0.0
    %1451 = vmatpush1.msra.mxu0 0.0
    %1452 = vmatprep.subr.mxu0 0.0
    %1453 = vmatpush1.msra.mxu0 0.0
    %1454 = vmatprep.subr.mxu0 0.0
    %1455 = vmatpush1.msra.mxu0 %v1421
    %1456 = vmatprep.subr.mxu0 0.0
    %1457 = vmatpush1.msra.mxu0 %v1420
    %1458 = vmatprep.subr.mxu0 0.0
    %1459 = vmatpush1.msra.mxu0 %v1419
    %1460 = vmatprep.subr.mxu0 0.0
    %1461 = vmatpush1.msra.mxu0 %v1418
    %1462 = vmatprep.subr.mxu0 0.0
    %1463 = vmatpush2.msra.mxu0 0.0
    %1464 = vmatprep.subr.mxu0 0.0
    %1465 = vmatpush2.msra.mxu0 0.0
    %1466 = vmatprep.subr.mxu0 0.0
    %1467 = vmatpush2.msra.mxu0 0.0
    %1468 = vmatprep.subr.mxu0 0.0
    %1469 = vmatpush2.msra.mxu0 0.0
    %1470 = vmatprep.subr.mxu0 0.0
    %1471 = vmatpush2.msra.mxu0 0.0
    %1472 = vmatprep.subr.mxu0 0.0
    %1473 = vmatpush2.msra.mxu0 0.0
    %1474 = vmatprep.subr.mxu0 0.0
    %1475 = vmatpush2.msra.mxu0 0.0
    %1476 = vmatprep.subr.mxu0 0.0
    %1477 = vmatpush2.msra.mxu0 0.0
    %1478 = vmatprep.subr.mxu0 0.0
    %1479 = vmatpush2.msra.mxu0 0.0
    %1480 = vmatprep.subr.mxu0 0.0
    %1481 = vmatpush2.msra.mxu0 0.0
    %1482 = vmatprep.subr.mxu0 0.0
    %1483 = vmatpush2.msra.mxu0 0.0
    %1484 = vmatprep.subr.mxu0 0.0
    %1485 = vmatpush2.msra.mxu0 0.0
    %1486 = vmatprep.subr.mxu0 0.0
    %1487 = vmatpush2.msra.mxu0 0.0
    %1488 = vmatprep.subr.mxu0 0.0
    %1489 = vmatpush2.msra.mxu0 0.0
    %1490 = vmatprep.subr.mxu0 0.0
    %1491 = vmatpush2.msra.mxu0 0.0
    %1492 = vmatprep.subr.mxu0 0.0
    %1493 = vmatpush2.msra.mxu0 0.0
    %1494 = vmatprep.mubr.f32.mxu0 0.0
    %1495 = vmatmul.mubr.f32.gmra.mxu0 %v1161
    %v1496 = vpop.f32.mrf.mxu0
    %v1497 = vadd.f32 %v1428, %v1496
    %v1498 = vpop.f32.mrf.mxu0
    %1499 = vmatprep.mubr.f32.mxu0 0.0
    %1500 = vmatmul.mubr.f32.gmra.mxu0 %v1164
    %v1501 = vpop.f32.mrf.mxu0
    %v1502 = vadd.f32 %v1428, %v1501
    %v1503 = vpop.f32.mrf.mxu0
    %1504 = vdwg.mxu0
    %1505 = vmatprep.subr.mxu0 0.0
    %1506 = vmatpush1.msra.mxu0 0.0
    %1507 = vmatprep.subr.mxu0 0.0
    %1508 = vmatpush1.msra.mxu0 0.0
    %1509 = vmatprep.subr.mxu0 0.0
    %1510 = vmatpush1.msra.mxu0 0.0
    %1511 = vmatprep.subr.mxu0 0.0
    %1512 = vmatpush1.msra.mxu0 0.0
    %1513 = vmatprep.subr.mxu0 0.0
    %1514 = vmatpush1.msra.mxu0 0.0
    %1515 = vmatprep.subr.mxu0 0.0
    %1516 = vmatpush1.msra.mxu0 0.0
    %1517 = vmatprep.subr.mxu0 0.0
    %1518 = vmatpush1.msra.mxu0 0.0
    %1519 = vmatprep.subr.mxu0 0.0
    %1520 = vmatpush1.msra.mxu0 0.0
    %1521 = vmatprep.subr.mxu0 0.0
    %1522 = vmatpush1.msra.mxu0 0.0
    %1523 = vmatprep.subr.mxu0 0.0
    %1524 = vmatpush1.msra.mxu0 0.0
    %1525 = vmatprep.subr.mxu0 0.0
    %1526 = vmatpush1.msra.mxu0 0.0
    %1527 = vmatprep.subr.mxu0 0.0
    %1528 = vmatpush1.msra.mxu0 0.0
    %1529 = vmatprep.subr.mxu0 0.0
    %1530 = vmatpush1.msra.mxu0 0.0
    %1531 = vmatprep.subr.mxu0 0.0
    %1532 = vmatpush1.msra.mxu0 0.0
    %1533 = vmatprep.subr.mxu0 0.0
    %1534 = vmatpush1.msra.mxu0 %v1238
    %1535 = vmatprep.subr.mxu0 0.0
    %1536 = vmatpush1.msra.mxu0 %v1233
    %1537 = vmatprep.subr.mxu0 0.0
    %1538 = vmatpush2.msra.mxu0 0.0
    %1539 = vmatprep.subr.mxu0 0.0
    %1540 = vmatpush2.msra.mxu0 0.0
    %1541 = vmatprep.subr.mxu0 0.0
    %1542 = vmatpush2.msra.mxu0 0.0
    %1543 = vmatprep.subr.mxu0 0.0
    %1544 = vmatpush2.msra.mxu0 0.0
    %1545 = vmatprep.subr.mxu0 0.0
    %1546 = vmatpush2.msra.mxu0 0.0
    %1547 = vmatprep.subr.mxu0 0.0
    %1548 = vmatpush2.msra.mxu0 0.0
    %1549 = vmatprep.subr.mxu0 0.0
    %1550 = vmatpush2.msra.mxu0 0.0
    %1551 = vmatprep.subr.mxu0 0.0
    %1552 = vmatpush2.msra.mxu0 0.0
    %1553 = vmatprep.subr.mxu0 0.0
    %1554 = vmatpush2.msra.mxu0 0.0
    %1555 = vmatprep.subr.mxu0 0.0
    %1556 = vmatpush2.msra.mxu0 0.0
    %1557 = vmatprep.subr.mxu0 0.0
    %1558 = vmatpush2.msra.mxu0 0.0
    %1559 = vmatprep.subr.mxu0 0.0
    %1560 = vmatpush2.msra.mxu0 0.0
    %1561 = vmatprep.subr.mxu0 0.0
    %1562 = vmatpush2.msra.mxu0 0.0
    %1563 = vmatprep.subr.mxu0 0.0
    %1564 = vmatpush2.msra.mxu0 0.0
    %1565 = vmatprep.subr.mxu0 0.0
    %1566 = vmatpush2.msra.mxu0 0.0
    %1567 = vmatprep.subr.mxu0 0.0
    %1568 = vmatpush2.msra.mxu0 0.0
    %1569 = vmatprep.mubr.f32.mxu0 0.0
    %1570 = vmatmul.mubr.f32.gmra.mxu0 %v455
    %v1571 = vpop.f32.mrf.mxu0
    %v1572 = vadd.f32 0.0, %v1571
    %v1573 = vpop.f32.mrf.mxu0
    %1574 = vmatprep.mubr.f32.mxu0 0.0
    %1575 = vmatmul.mubr.f32.gmra.mxu0 %v458
    %v1576 = vpop.f32.mrf.mxu0
    %v1577 = vadd.f32 0.0, %v1576
    %v1578 = vpop.f32.mrf.mxu0
    %1579 = vdwg.mxu0
    %1580 = vmatprep.subr.mxu0 0.0
    %1581 = vmatpush1.msra.mxu0 0.0
    %1582 = vmatprep.subr.mxu0 0.0
    %1583 = vmatpush1.msra.mxu0 0.0
    %1584 = vmatprep.subr.mxu0 0.0
    %1585 = vmatpush1.msra.mxu0 0.0
    %1586 = vmatprep.subr.mxu0 0.0
    %1587 = vmatpush1.msra.mxu0 0.0
    %1588 = vmatprep.subr.mxu0 0.0
    %1589 = vmatpush1.msra.mxu0 0.0
    %1590 = vmatprep.subr.mxu0 0.0
    %1591 = vmatpush1.msra.mxu0 0.0
    %1592 = vmatprep.subr.mxu0 0.0
    %1593 = vmatpush1.msra.mxu0 0.0
    %1594 = vmatprep.subr.mxu0 0.0
    %1595 = vmatpush1.msra.mxu0 0.0
    %1596 = vmatprep.subr.mxu0 0.0
    %1597 = vmatpush1.msra.mxu0 0.0
    %1598 = vmatprep.subr.mxu0 0.0
    %1599 = vmatpush1.msra.mxu0 0.0
    %1600 = vmatprep.subr.mxu0 0.0
    %1601 = vmatpush1.msra.mxu0 0.0
    %1602 = vmatprep.subr.mxu0 0.0
    %1603 = vmatpush1.msra.mxu0 0.0
    %1604 = vmatprep.subr.mxu0 0.0
    %1605 = vmatpush1.msra.mxu0 0.0
    %1606 = vmatprep.subr.mxu0 0.0
    %1607 = vmatpush1.msra.mxu0 0.0
    %1608 = vmatprep.subr.mxu0 0.0
    %1609 = vmatpush1.msra.mxu0 %v1326
    %1610 = vmatprep.subr.mxu0 0.0
    %1611 = vmatpush1.msra.mxu0 %v1321
    %1612 = vmatprep.subr.mxu0 0.0
    %1613 = vmatpush2.msra.mxu0 0.0
    %1614 = vmatprep.subr.mxu0 0.0
    %1615 = vmatpush2.msra.mxu0 0.0
    %1616 = vmatprep.subr.mxu0 0.0
    %1617 = vmatpush2.msra.mxu0 0.0
    %1618 = vmatprep.subr.mxu0 0.0
    %1619 = vmatpush2.msra.mxu0 0.0
    %1620 = vmatprep.subr.mxu0 0.0
    %1621 = vmatpush2.msra.mxu0 0.0
    %1622 = vmatprep.subr.mxu0 0.0
    %1623 = vmatpush2.msra.mxu0 0.0
    %1624 = vmatprep.subr.mxu0 0.0
    %1625 = vmatpush2.msra.mxu0 0.0
    %1626 = vmatprep.subr.mxu0 0.0
    %1627 = vmatpush2.msra.mxu0 0.0
    %1628 = vmatprep.subr.mxu0 0.0
    %1629 = vmatpush2.msra.mxu0 0.0
    %1630 = vmatprep.subr.mxu0 0.0
    %1631 = vmatpush2.msra.mxu0 0.0
    %1632 = vmatprep.subr.mxu0 0.0
    %1633 = vmatpush2.msra.mxu0 0.0
    %1634 = vmatprep.subr.mxu0 0.0
    %1635 = vmatpush2.msra.mxu0 0.0
    %1636 = vmatprep.subr.mxu0 0.0
    %1637 = vmatpush2.msra.mxu0 0.0
    %1638 = vmatprep.subr.mxu0 0.0
    %1639 = vmatpush2.msra.mxu0 0.0
    %1640 = vmatprep.subr.mxu0 0.0
    %1641 = vmatpush2.msra.mxu0 0.0
    %1642 = vmatprep.subr.mxu0 0.0
    %1643 = vmatpush2.msra.mxu0 0.0
    %1644 = vmatprep.mubr.f32.mxu0 0.0
    %1645 = vmatmul.mubr.f32.gmra.mxu0 %v536
    %v1646 = vpop.f32.mrf.mxu0
    %v1647 = vadd.f32 0.0, %v1646
    %v1648 = vpop.f32.mrf.mxu0
    %1649 = vmatprep.mubr.f32.mxu0 0.0
    %1650 = vmatmul.mubr.f32.gmra.mxu0 %v539
    %v1651 = vpop.f32.mrf.mxu0
    %v1652 = vadd.f32 0.0, %v1651
    %v1653 = vpop.f32.mrf.mxu0
    %1654 = vdwg.mxu0
    %1655 = vmatprep.subr.mxu0 0.0
    %1656 = vmatpush1.msra.mxu0 0.0
    %1657 = vmatprep.subr.mxu0 0.0
    %1658 = vmatpush1.msra.mxu0 0.0
    %1659 = vmatprep.subr.mxu0 0.0
    %1660 = vmatpush1.msra.mxu0 0.0
    %1661 = vmatprep.subr.mxu0 0.0
    %1662 = vmatpush1.msra.mxu0 0.0
    %1663 = vmatprep.subr.mxu0 0.0
    %1664 = vmatpush1.msra.mxu0 0.0
    %1665 = vmatprep.subr.mxu0 0.0
    %1666 = vmatpush1.msra.mxu0 0.0
    %1667 = vmatprep.subr.mxu0 0.0
    %1668 = vmatpush1.msra.mxu0 0.0
    %1669 = vmatprep.subr.mxu0 0.0
    %1670 = vmatpush1.msra.mxu0 0.0
    %1671 = vmatprep.subr.mxu0 0.0
    %1672 = vmatpush1.msra.mxu0 0.0
    %1673 = vmatprep.subr.mxu0 0.0
    %1674 = vmatpush1.msra.mxu0 0.0
    %1675 = vmatprep.subr.mxu0 0.0
    %1676 = vmatpush1.msra.mxu0 0.0
    %1677 = vmatprep.subr.mxu0 0.0
    %1678 = vmatpush1.msra.mxu0 0.0
    %1679 = vmatprep.subr.mxu0 0.0
    %1680 = vmatpush1.msra.mxu0 0.0
    %1681 = vmatprep.subr.mxu0 0.0
    %1682 = vmatpush1.msra.mxu0 0.0
    %1683 = vmatprep.subr.mxu0 0.0
    %1684 = vmatpush1.msra.mxu0 %v1414
    %1685 = vmatprep.subr.mxu0 0.0
    %1686 = vmatpush1.msra.mxu0 %v1409
    %1687 = vmatprep.subr.mxu0 0.0
    %1688 = vmatpush2.msra.mxu0 0.0
    %1689 = vmatprep.subr.mxu0 0.0
    %1690 = vmatpush2.msra.mxu0 0.0
    %1691 = vmatprep.subr.mxu0 0.0
    %1692 = vmatpush2.msra.mxu0 0.0
    %1693 = vmatprep.subr.mxu0 0.0
    %1694 = vmatpush2.msra.mxu0 0.0
    %1695 = vmatprep.subr.mxu0 0.0
    %1696 = vmatpush2.msra.mxu0 0.0
    %1697 = vmatprep.subr.mxu0 0.0
    %1698 = vmatpush2.msra.mxu0 0.0
    %1699 = vmatprep.subr.mxu0 0.0
    %1700 = vmatpush2.msra.mxu0 0.0
    %1701 = vmatprep.subr.mxu0 0.0
    %1702 = vmatpush2.msra.mxu0 0.0
    %1703 = vmatprep.subr.mxu0 0.0
    %1704 = vmatpush2.msra.mxu0 0.0
    %1705 = vmatprep.subr.mxu0 0.0
    %1706 = vmatpush2.msra.mxu0 0.0
    %1707 = vmatprep.subr.mxu0 0.0
    %1708 = vmatpush2.msra.mxu0 0.0
    %1709 = vmatprep.subr.mxu0 0.0
    %1710 = vmatpush2.msra.mxu0 0.0
    %1711 = vmatprep.subr.mxu0 0.0
    %1712 = vmatpush2.msra.mxu0 0.0
    %1713 = vmatprep.subr.mxu0 0.0
    %1714 = vmatpush2.msra.mxu0 0.0
    %1715 = vmatprep.subr.mxu0 0.0
    %1716 = vmatpush2.msra.mxu0 0.0
    %1717 = vmatprep.subr.mxu0 0.0
    %1718 = vmatpush2.msra.mxu0 0.0
    %1719 = vmatprep.mubr.f32.mxu0 0.0
    %1720 = vmatmul.mubr.f32.gmra.mxu0 %v617
    %v1721 = vpop.f32.mrf.mxu0
    %v1722 = vadd.f32 0.0, %v1721
    %v1723 = vpop.f32.mrf.mxu0
    %1724 = vmatprep.mubr.f32.mxu0 0.0
    %1725 = vmatmul.mubr.f32.gmra.mxu0 %v620
    %v1726 = vpop.f32.mrf.mxu0
    %v1727 = vadd.f32 0.0, %v1726
    %v1728 = vpop.f32.mrf.mxu0
    %1729 = vdwg.mxu0
    %v1731 = vsel %vm107, %v1647, 0
    %v1734 = vsel %vm107, %v1652, 0
    %v1737 = vsel %vm107, %v1722, 0
    %v1740 = vsel %vm107, %v1727, 0
    %v1743 = vsel %vm107, %v1572, 0
    %v1746 = vsel %vm107, %v1577, 0
    %1748 = vmatprep.subr.mxu0 0.0
    %1749 = vmatpush1.xpose.msra.mxu0 0.0
    %1750 = vmatprep.subr.mxu0 0.0
    %1751 = vmatpush1.xpose.msra.mxu0 0.0
    %1752 = vmatprep.subr.mxu0 0.0
    %1753 = vmatpush1.xpose.msra.mxu0 0.0
    %1754 = vmatprep.subr.mxu0 0.0
    %1755 = vmatpush1.xpose.msra.mxu0 0.0
    %1756 = vmatprep.subr.mxu0 0.0
    %1757 = vmatpush1.xpose.msra.mxu0 0.0
    %1758 = vmatprep.subr.mxu0 0.0
    %1759 = vmatpush1.xpose.msra.mxu0 0.0
    %1760 = vmatprep.subr.mxu0 0.0
    %1761 = vmatpush1.xpose.msra.mxu0 0.0
    %1762 = vmatprep.subr.mxu0 0.0
    %1763 = vmatpush1.xpose.msra.mxu0 0.0
    %1764 = vmatprep.subr.mxu0 0.0
    %1765 = vmatpush1.xpose.msra.mxu0 0.0
    %1766 = vmatprep.subr.mxu0 0.0
    %1767 = vmatpush1.xpose.msra.mxu0 0.0
    %1768 = vmatprep.subr.mxu0 0.0
    %1769 = vmatpush1.xpose.msra.mxu0 0.0
    %1770 = vmatprep.subr.mxu0 0.0
    %1771 = vmatpush1.xpose.msra.mxu0 0.0
    %1772 = vmatprep.subr.mxu0 0.0
    %1773 = vmatpush1.xpose.msra.mxu0 0.0
    %1774 = vmatprep.subr.mxu0 0.0
    %1775 = vmatpush1.xpose.msra.mxu0 0.0
    %1776 = vmatprep.subr.mxu0 0.0
    %1777 = vmatpush1.xpose.msra.mxu0 %v1746
    %1778 = vmatprep.subr.mxu0 0.0
    %1779 = vmatpush1.xpose.msra.mxu0 %v1743
    %1780 = vmatprep.subr.mxu0 0.0
    %1781 = vmatpush2.xpose.msra.mxu0 0.0
    %1782 = vmatprep.subr.mxu0 0.0
    %1783 = vmatpush2.xpose.msra.mxu0 0.0
    %1784 = vmatprep.subr.mxu0 0.0
    %1785 = vmatpush2.xpose.msra.mxu0 0.0
    %1786 = vmatprep.subr.mxu0 0.0
    %1787 = vmatpush2.xpose.msra.mxu0 0.0
    %1788 = vmatprep.subr.mxu0 0.0
    %1789 = vmatpush2.xpose.msra.mxu0 0.0
    %1790 = vmatprep.subr.mxu0 0.0
    %1791 = vmatpush2.xpose.msra.mxu0 0.0
    %1792 = vmatprep.subr.mxu0 0.0
    %1793 = vmatpush2.xpose.msra.mxu0 0.0
    %1794 = vmatprep.subr.mxu0 0.0
    %1795 = vmatpush2.xpose.msra.mxu0 0.0
    %1796 = vmatprep.subr.mxu0 0.0
    %1797 = vmatpush2.xpose.msra.mxu0 0.0
    %1798 = vmatprep.subr.mxu0 0.0
    %1799 = vmatpush2.xpose.msra.mxu0 0.0
    %1800 = vmatprep.subr.mxu0 0.0
    %1801 = vmatpush2.xpose.msra.mxu0 0.0
    %1802 = vmatprep.subr.mxu0 0.0
    %1803 = vmatpush2.xpose.msra.mxu0 0.0
    %1804 = vmatprep.subr.mxu0 0.0
    %1805 = vmatpush2.xpose.msra.mxu0 0.0
    %1806 = vmatprep.subr.mxu0 0.0
    %1807 = vmatpush2.xpose.msra.mxu0 0.0
    %1808 = vmatprep.subr.mxu0 0.0
    %1809 = vmatpush2.xpose.msra.mxu0 0.0
    %1810 = vmatprep.subr.mxu0 0.0
    %1811 = vmatpush2.xpose.msra.mxu0 0.0
    %1812 = vmatprep.mubr.f32.mxu0 0.0
    %1813 = vmatmul.mubr.f32.gmra.mxu0 %v1731
    %v1814 = vpop.f32.mrf.mxu0
    %v1815 = vadd.f32 %v84, %v1814
    %v1816 = vpop.f32.mrf.mxu0
    %1817 = vmatprep.mubr.f32.mxu0 0.0
    %1818 = vmatmul.mubr.f32.gmra.mxu0 %v1734
    %v1819 = vpop.f32.mrf.mxu0
    %v1820 = vadd.f32 %v85, %v1819
    %v1821 = vpop.f32.mrf.mxu0
    %1822 = vmatprep.mubr.f32.mxu0 0.0
    %1823 = vmatmul.mubr.f32.gmra.mxu0 %v1737
    %v1824 = vpop.f32.mrf.mxu0
    %v1825 = vadd.f32 %v86, %v1824
    %v1826 = vpop.f32.mrf.mxu0
    %1827 = vmatprep.mubr.f32.mxu0 0.0
    %1828 = vmatmul.mubr.f32.gmra.mxu0 %v1740
    %v1829 = vpop.f32.mrf.mxu0
    %v1830 = vadd.f32 %v87, %v1829
    %v1831 = vpop.f32.mrf.mxu0
    %1832 = vdwg.mxu0
    %v1833 = vsel %vm453, %v1815, -inf
    %1834 = vmax.xlane.f32.xlu0 %v1833
    %v1835 = vpop.xlane.xlu0 %1834
    %v1836 = vsel %vm453, %v1820, -inf
    %1837 = vmax.xlane.f32.xlu0 %v1836
    %v1838 = vpop.xlane.xlu0 %1837
    %v1839 = vsel %vm453, %v1825, -inf
    %1840 = vmax.xlane.f32.xlu0 %v1839
    %v1841 = vpop.xlane.xlu0 %1840
    %v1842 = vsel %vm453, %v1830, -inf
    %1843 = vmax.xlane.f32.xlu0 %v1842
    %v1844 = vpop.xlane.xlu0 %1843
    %v1845 = vsub.f32 %v1815, %v1835
    %v1846 = vsub.f32 %v1820, %v1838
    %v1847 = vsub.f32 %v1825, %v1841
    %v1848 = vsub.f32 %v1830, %v1844
    %v1849 = vmul.f32 %v1845, 1.442695
    %v1850 = vpow.pop %v1849
    %v1851 = vmul.f32 %v1846, 1.442695
    %v1852 = vpow.pop %v1851
    %v1853 = vmul.f32 %v1847, 1.442695
    %v1854 = vpow.pop %v1853
    %v1855 = vmul.f32 %v1848, 1.442695
    %v1856 = vpow.pop %v1855
    %v1857 = vsel %vm453, %v1850, 0.0
    %1858 = vadd.xlane.f32.xlu0 %v1857
    %v1859 = vpop.xlane.xlu0 %1858
    %v1860 = vsel %vm453, %v1852, 0.0
    %1861 = vadd.xlane.f32.xlu0 %v1860
    %v1862 = vpop.xlane.xlu0 %1861
    %v1863 = vsel %vm453, %v1854, 0.0
    %1864 = vadd.xlane.f32.xlu0 %v1863
    %v1865 = vpop.xlane.xlu0 %1864
    %v1866 = vsel %vm453, %v1856, 0.0
    %1867 = vadd.xlane.f32.xlu0 %v1866
    %v1868 = vpop.xlane.xlu0 %1867
    %v1869 = vrcp.pop %v1859
    %v1870 = vrcp.pop %v1862
    %v1871 = vrcp.pop %v1865
    %v1872 = vrcp.pop %v1868
    %v1873 = vmul.f32 %v1850, %v1869
    %v1874 = vmul.f32 %v1852, %v1870
    %v1875 = vmul.f32 %v1854, %v1871
    %v1876 = vmul.f32 %v1856, %v1872
    %v1878 = vsel %vm453, %v1873, 0
    %v1881 = vsel %vm453, %v1874, 0
    %v1884 = vsel %vm453, %v1875, 0
    %v1887 = vsel %vm453, %v1876, 0
    %1889 = vmatprep.subr.mxu0 0.0
    %1890 = vmatpush1.msra.mxu0 0.0
    %1891 = vmatprep.subr.mxu0 0.0
    %1892 = vmatpush1.msra.mxu0 0.0
    %1893 = vmatprep.subr.mxu0 0.0
    %1894 = vmatpush1.msra.mxu0 0.0
    %1895 = vmatprep.subr.mxu0 0.0
    %1896 = vmatpush1.msra.mxu0 0.0
    %1897 = vmatprep.subr.mxu0 0.0
    %1898 = vmatpush1.msra.mxu0 0.0
    %1899 = vmatprep.subr.mxu0 0.0
    %1900 = vmatpush1.msra.mxu0 0.0
    %1901 = vmatprep.subr.mxu0 0.0
    %1902 = vmatpush1.msra.mxu0 0.0
    %1903 = vmatprep.subr.mxu0 0.0
    %1904 = vmatpush1.msra.mxu0 0.0
    %1905 = vmatprep.subr.mxu0 0.0
    %1906 = vmatpush1.msra.mxu0 0.0
    %1907 = vmatprep.subr.mxu0 0.0
    %1908 = vmatpush1.msra.mxu0 0.0
    %1909 = vmatprep.subr.mxu0 0.0
    %1910 = vmatpush1.msra.mxu0 0.0
    %1911 = vmatprep.subr.mxu0 0.0
    %1912 = vmatpush1.msra.mxu0 0.0
    %1913 = vmatprep.subr.mxu0 0.0
    %1914 = vmatpush1.msra.mxu0 0.0
    %1915 = vmatprep.subr.mxu0 0.0
    %1916 = vmatpush1.msra.mxu0 0.0
    %1917 = vmatprep.subr.mxu0 0.0
    %1918 = vmatpush1.msra.mxu0 %v1577
    %1919 = vmatprep.subr.mxu0 0.0
    %1920 = vmatpush1.msra.mxu0 %v1572
    %1921 = vmatprep.subr.mxu0 0.0
    %1922 = vmatpush2.msra.mxu0 0.0
    %1923 = vmatprep.subr.mxu0 0.0
    %1924 = vmatpush2.msra.mxu0 0.0
    %1925 = vmatprep.subr.mxu0 0.0
    %1926 = vmatpush2.msra.mxu0 0.0
    %1927 = vmatprep.subr.mxu0 0.0
    %1928 = vmatpush2.msra.mxu0 0.0
    %1929 = vmatprep.subr.mxu0 0.0
    %1930 = vmatpush2.msra.mxu0 0.0
    %1931 = vmatprep.subr.mxu0 0.0
    %1932 = vmatpush2.msra.mxu0 0.0
    %1933 = vmatprep.subr.mxu0 0.0
    %1934 = vmatpush2.msra.mxu0 0.0
    %1935 = vmatprep.subr.mxu0 0.0
    %1936 = vmatpush2.msra.mxu0 0.0
    %1937 = vmatprep.subr.mxu0 0.0
    %1938 = vmatpush2.msra.mxu0 0.0
    %1939 = vmatprep.subr.mxu0 0.0
    %1940 = vmatpush2.msra.mxu0 0.0
    %1941 = vmatprep.subr.mxu0 0.0
    %1942 = vmatpush2.msra.mxu0 0.0
    %1943 = vmatprep.subr.mxu0 0.0
    %1944 = vmatpush2.msra.mxu0 0.0
    %1945 = vmatprep.subr.mxu0 0.0
    %1946 = vmatpush2.msra.mxu0 0.0
    %1947 = vmatprep.subr.mxu0 0.0
    %1948 = vmatpush2.msra.mxu0 0.0
    %1949 = vmatprep.subr.mxu0 0.0
    %1950 = vmatpush2.msra.mxu0 0.0
    %1951 = vmatprep.subr.mxu0 0.0
    %1952 = vmatpush2.msra.mxu0 0.0
    %1953 = vmatprep.mubr.f32.mxu0 0.0
    %1954 = vmatmul.mubr.f32.gmra.mxu0 %v1878
    %v1955 = vpop.f32.mrf.mxu0
    %v1956 = vadd.f32 0.0, %v1955
    %v1957 = vpop.f32.mrf.mxu0
    %1958 = vmatprep.mubr.f32.mxu0 0.0
    %1959 = vmatmul.mubr.f32.gmra.mxu0 %v1881
    %v1960 = vpop.f32.mrf.mxu0
    %v1961 = vadd.f32 0.0, %v1960
    %v1962 = vpop.f32.mrf.mxu0
    %1963 = vmatprep.mubr.f32.mxu0 0.0
    %1964 = vmatmul.mubr.f32.gmra.mxu0 %v1884
    %v1965 = vpop.f32.mrf.mxu0
    %v1966 = vadd.f32 0.0, %v1965
    %v1967 = vpop.f32.mrf.mxu0
    %1968 = vmatprep.mubr.f32.mxu0 0.0
    %1969 = vmatmul.mubr.f32.gmra.mxu0 %v1887
    %v1970 = vpop.f32.mrf.mxu0
    %v1971 = vadd.f32 0.0, %v1970
    %v1972 = vpop.f32.mrf.mxu0
    %1973 = vdwg.mxu0
    %s1974 = scalar_lea.vmem [#allocation8], 64
    %v1975 = vld [vmem:[%s1974] sm:$0xff]
    %v1976 = vld [vmem:[%s1974 + $0x8] sm:$0xff]
    %v1977 = vld [vmem:[%s1974 + $0x10] sm:$0xff]
    %v1978 = vld [vmem:[%s1974 + $0x18] sm:$0xff]
    %s1979 = scalar_lea.vmem [#allocation8], 96
    %v1980 = vld [vmem:[%s1979] sm:$0xff]
    %v1981 = vld [vmem:[%s1979 + $0x8] sm:$0xff]
    %v1982 = vld [vmem:[%s1979 + $0x10] sm:$0xff]
    %v1983 = vld [vmem:[%s1979 + $0x18] sm:$0xff]
    %v1985 = vsel %vm107, %v1966, 0
    %v1988 = vsel %vm107, %v1971, 0
    %1990 = vmatprep.subr.mxu0 0.0
    %1991 = vmatpush1.msra.mxu0 0.0
    %1992 = vmatprep.subr.mxu0 0.0
    %1993 = vmatpush1.msra.mxu0 0.0
    %1994 = vmatprep.subr.mxu0 0.0
    %1995 = vmatpush1.msra.mxu0 0.0
    %1996 = vmatprep.subr.mxu0 0.0
    %1997 = vmatpush1.msra.mxu0 0.0
    %1998 = vmatprep.subr.mxu0 0.0
    %1999 = vmatpush1.msra.mxu0 0.0
    %2000 = vmatprep.subr.mxu0 0.0
    %2001 = vmatpush1.msra.mxu0 0.0
    %2002 = vmatprep.subr.mxu0 0.0
    %2003 = vmatpush1.msra.mxu0 0.0
    %2004 = vmatprep.subr.mxu0 0.0
    %2005 = vmatpush1.msra.mxu0 0.0
    %2006 = vmatprep.subr.mxu0 0.0
    %2007 = vmatpush1.msra.mxu0 0.0
    %2008 = vmatprep.subr.mxu0 0.0
    %2009 = vmatpush1.msra.mxu0 0.0
    %2010 = vmatprep.subr.mxu0 0.0
    %2011 = vmatpush1.msra.mxu0 0.0
    %2012 = vmatprep.subr.mxu0 0.0
    %2013 = vmatpush1.msra.mxu0 0.0
    %2014 = vmatprep.subr.mxu0 0.0
    %2015 = vmatpush1.msra.mxu0 %v1983
    %2016 = vmatprep.subr.mxu0 0.0
    %2017 = vmatpush1.msra.mxu0 %v1982
    %2018 = vmatprep.subr.mxu0 0.0
    %2019 = vmatpush1.msra.mxu0 %v1981
    %2020 = vmatprep.subr.mxu0 0.0
    %2021 = vmatpush1.msra.mxu0 %v1980
    %2022 = vmatprep.subr.mxu0 0.0
    %2023 = vmatpush2.msra.mxu0 0.0
    %2024 = vmatprep.subr.mxu0 0.0
    %2025 = vmatpush2.msra.mxu0 0.0
    %2026 = vmatprep.subr.mxu0 0.0
    %2027 = vmatpush2.msra.mxu0 0.0
    %2028 = vmatprep.subr.mxu0 0.0
    %2029 = vmatpush2.msra.mxu0 0.0
    %2030 = vmatprep.subr.mxu0 0.0
    %2031 = vmatpush2.msra.mxu0 0.0
    %2032 = vmatprep.subr.mxu0 0.0
    %2033 = vmatpush2.msra.mxu0 0.0
    %2034 = vmatprep.subr.mxu0 0.0
    %2035 = vmatpush2.msra.mxu0 0.0
    %2036 = vmatprep.subr.mxu0 0.0
    %2037 = vmatpush2.msra.mxu0 0.0
    %2038 = vmatprep.subr.mxu0 0.0
    %2039 = vmatpush2.msra.mxu0 0.0
    %2040 = vmatprep.subr.mxu0 0.0
    %2041 = vmatpush2.msra.mxu0 0.0
    %2042 = vmatprep.subr.mxu0 0.0
    %2043 = vmatpush2.msra.mxu0 0.0
    %2044 = vmatprep.subr.mxu0 0.0
    %2045 = vmatpush2.msra.mxu0 0.0
    %2046 = vmatprep.subr.mxu0 0.0
    %2047 = vmatpush2.msra.mxu0 0.0
    %2048 = vmatprep.subr.mxu0 0.0
    %2049 = vmatpush2.msra.mxu0 0.0
    %2050 = vmatprep.subr.mxu0 0.0
    %2051 = vmatpush2.msra.mxu0 0.0
    %2052 = vmatprep.subr.mxu0 0.0
    %2053 = vmatpush2.msra.mxu0 0.0
    %2054 = vmatprep.mubr.f32.mxu0 0.0
    %2055 = vmatmul.mubr.f32.gmra.mxu0 %v1985
    %v2056 = vpop.f32.mrf.mxu0
    %v2057 = vadd.f32 0.0, %v2056
    %v2058 = vpop.f32.mrf.mxu0
    %2059 = vmatprep.mubr.f32.mxu0 0.0
    %2060 = vmatmul.mubr.f32.gmra.mxu0 %v1988
    %v2061 = vpop.f32.mrf.mxu0
    %v2062 = vadd.f32 0.0, %v2061
    %v2063 = vpop.f32.mrf.mxu0
    %2064 = vdwg.mxu0
    %v2066 = vsel %vm107, %v1956, 0
    %v2069 = vsel %vm107, %v1961, 0
    %2071 = vmatprep.subr.mxu0 0.0
    %2072 = vmatpush1.msra.mxu0 0.0
    %2073 = vmatprep.subr.mxu0 0.0
    %2074 = vmatpush1.msra.mxu0 0.0
    %2075 = vmatprep.subr.mxu0 0.0
    %2076 = vmatpush1.msra.mxu0 0.0
    %2077 = vmatprep.subr.mxu0 0.0
    %2078 = vmatpush1.msra.mxu0 0.0
    %2079 = vmatprep.subr.mxu0 0.0
    %2080 = vmatpush1.msra.mxu0 0.0
    %2081 = vmatprep.subr.mxu0 0.0
    %2082 = vmatpush1.msra.mxu0 0.0
    %2083 = vmatprep.subr.mxu0 0.0
    %2084 = vmatpush1.msra.mxu0 0.0
    %2085 = vmatprep.subr.mxu0 0.0
    %2086 = vmatpush1.msra.mxu0 0.0
    %2087 = vmatprep.subr.mxu0 0.0
    %2088 = vmatpush1.msra.mxu0 0.0
    %2089 = vmatprep.subr.mxu0 0.0
    %2090 = vmatpush1.msra.mxu0 0.0
    %2091 = vmatprep.subr.mxu0 0.0
    %2092 = vmatpush1.msra.mxu0 0.0
    %2093 = vmatprep.subr.mxu0 0.0
    %2094 = vmatpush1.msra.mxu0 0.0
    %2095 = vmatprep.subr.mxu0 0.0
    %2096 = vmatpush1.msra.mxu0 %v1978
    %2097 = vmatprep.subr.mxu0 0.0
    %2098 = vmatpush1.msra.mxu0 %v1977
    %2099 = vmatprep.subr.mxu0 0.0
    %2100 = vmatpush1.msra.mxu0 %v1976
    %2101 = vmatprep.subr.mxu0 0.0
    %2102 = vmatpush1.msra.mxu0 %v1975
    %2103 = vmatprep.subr.mxu0 0.0
    %2104 = vmatpush2.msra.mxu0 0.0
    %2105 = vmatprep.subr.mxu0 0.0
    %2106 = vmatpush2.msra.mxu0 0.0
    %2107 = vmatprep.subr.mxu0 0.0
    %2108 = vmatpush2.msra.mxu0 0.0
    %2109 = vmatprep.subr.mxu0 0.0
    %2110 = vmatpush2.msra.mxu0 0.0
    %2111 = vmatprep.subr.mxu0 0.0
    %2112 = vmatpush2.msra.mxu0 0.0
    %2113 = vmatprep.subr.mxu0 0.0
    %2114 = vmatpush2.msra.mxu0 0.0
    %2115 = vmatprep.subr.mxu0 0.0
    %2116 = vmatpush2.msra.mxu0 0.0
    %2117 = vmatprep.subr.mxu0 0.0
    %2118 = vmatpush2.msra.mxu0 0.0
    %2119 = vmatprep.subr.mxu0 0.0
    %2120 = vmatpush2.msra.mxu0 0.0
    %2121 = vmatprep.subr.mxu0 0.0
    %2122 = vmatpush2.msra.mxu0 0.0
    %2123 = vmatprep.subr.mxu0 0.0
    %2124 = vmatpush2.msra.mxu0 0.0
    %2125 = vmatprep.subr.mxu0 0.0
    %2126 = vmatpush2.msra.mxu0 0.0
    %2127 = vmatprep.subr.mxu0 0.0
    %2128 = vmatpush2.msra.mxu0 0.0
    %2129 = vmatprep.subr.mxu0 0.0
    %2130 = vmatpush2.msra.mxu0 0.0
    %2131 = vmatprep.subr.mxu0 0.0
    %2132 = vmatpush2.msra.mxu0 0.0
    %2133 = vmatprep.subr.mxu0 0.0
    %2134 = vmatpush2.msra.mxu0 0.0
    %2135 = vmatprep.mubr.f32.mxu0 0.0
    %2136 = vmatmul.mubr.f32.gmra.mxu0 %v2066
    %v2137 = vpop.f32.mrf.mxu0
    %v2138 = vadd.f32 %v2057, %v2137
    %v2139 = vpop.f32.mrf.mxu0
    %2140 = vmatprep.mubr.f32.mxu0 0.0
    %2141 = vmatmul.mubr.f32.gmra.mxu0 %v2069
    %v2142 = vpop.f32.mrf.mxu0
    %v2143 = vadd.f32 %v2062, %v2142
    %v2144 = vpop.f32.mrf.mxu0
    %2145 = vdwg.mxu0
    %s2146 = scalar_lea.vmem %s6, 1
    %v2147 = vld [vmem:[%s2146] sm:$0x1]
    %v2149 = vlaneseq
    %v2150 = vshrl.u32 %v2149, 7
    %v2151 = vsub.s32 0, %v2150
    %v2152 = vrot.slane %v2147, %v2151
    %v2154 = vadd.f32 %v2138, %v2152
    %v2155 = vadd.f32 %v2143, %v2152
    %v2156 = vadd.f32 %v1647, %v1722
    %v2157 = vadd.f32 %v1652, %v1727
    %v2158 = vadd.f32 %v2156, %v2154
    %v2159 = vadd.f32 %v2157, %v2155
    %v2160 = vmax.f32 %v2158, 0.0
    %v2161 = vmax.f32 %v2159, 0.0
    %v2162 = vxor.u32 %v1497, 2147483648
    %v2163 = vxor.u32 %v1502, 2147483648
    %v2164 = vmul.f32 %v2162, 1.442695
    %v2165 = vpow.pop %v2164
    %v2166 = vmul.f32 %v2163, 1.442695
    %v2167 = vpow.pop %v2166
    %v2168 = vadd.f32 %v2165, 1.0
    %v2169 = vadd.f32 %v2167, 1.0
    %v2170 = vrcp.pop %v2168
    %v2171 = vmul.f32 1.0, %v2170
    %v2172 = vrcp.pop %v2169
    %v2173 = vmul.f32 1.0, %v2172
    %v2174 = vmul.f32 %v2160, %v2171
    %v2175 = vmul.f32 %v2161, %v2173
    %v2176 = vsub.f32 1.0, %v2171
    %v2177 = vsub.f32 1.0, %v2173
    %v2178 = vmul.f32 %v1145, %v2176
    %v2179 = vmul.f32 %v1146, %v2177
    %v2180 = vadd.f32 %v2174, %v2178
    %v2181 = vadd.f32 %v2175, %v2179
    %2182 = vst.msk [vmem:[#allocation10] sm:$0xff] %vm107, %v2180
    %2183 = vst.msk [vmem:[#allocation10 + $0x8] sm:$0xff] %vm107, %v2181
    // Predicated region
    $region46: #{tpu_custom_call.1} parent=1 // pred_check
      _
    $region47: #{tpu_custom_call.1} parent=1 // pred_check_branch
      %2185 = sbr.rel (0) target = $region49
    $region48: #{tpu_custom_call.1} parent=1 // pred_region
      %s2187 = ssub.s32 256, 256
      %2188 = vsyncadd [#allocation4], %s2187
      %s2189 = sshll.u32 [#allocation10], 4
      %s2190 = int_to_ptr.vmem [resolvable:$true] %s2189
      %2195 = dma.vmem_to_hbm [thread:$0]  %s2190, 256, %s7, [#allocation4], 128, 128, 8
    $region49: #{tpu_custom_call.1} parent=1 // pred_fallthru
      _
    // Predicated region
    $region50: #{tpu_custom_call.1} parent=1 // pred_check
      _
    $region51: #{tpu_custom_call.1} parent=1 // pred_check_branch
      %2197 = sbr.rel (0) target = $region53
    $region52: #{tpu_custom_call.1} parent=1 // pred_region
      %2198 = dma.done [#allocation4], 256
    $region53: #{tpu_custom_call.1} parent=1 // pred_fallthru
      _
    %2199 = vsyncpa [#allocation3], 1
    %2200 = vsyncpa [#allocation6], 1
    %2201 = vsyncpa [#allocation9], 1
    %2202 = vsyncpa [#allocation4], 1

</llo_original>
